<compile_context>
chip_gen: v6e
topology: v6e:2x2x1
jax: 0.10.0
libtpu: 0.0.40
codegen_flags: <defaults>
</compile_context>

<pallas_src>
import functools

import jax
import jax.numpy as jnp
from jax.experimental import pallas as pl
from jax.experimental.pallas import tpu as pltpu

INPUT_SIZE = 400          # forward hard-codes the :200 / 200: split -> input_size = 400
HALF = INPUT_SIZE // 2    # 200
HIDDEN = 8                # hidden_dim (small, synthetic)
EPS = 1e-5                # nn.BatchNorm1d default eps
LANE_CHUNK = 128          # one lane group (vreg width) of batch rows per inner step
BATCH_TILE = 1024         # rows per grid step (multiple of LANE_CHUNK)


def _round_up(a, b):
    return -(-a // b) * b


def _fcn_combo_kernel(hidden, num_chunks,
                      x_ref, ao_ref, an_ref, c_ref, w2_ref, b2_ref, out_ref):
    # x_ref  : (num_chunks, 400, 128) -- features on sublanes, batch on lanes
    # ao/an/c/w2_ref : (hidden, 200, 128) coefficient planes, pre-replicated
    #                  across the 128-lane batch axis (no in-kernel broadcasts)
    # b2_ref : (1,) in SMEM
    # out_ref: (num_chunks, 1, 128)
    b2 = b2_ref[0]

    def chunk_body(j, carry):
        xc = x_ref[j]                     # (400, 128), one aligned load
        xo = xc[:HALF, :]                 # (200, 128) "orig" features
        xn = xc[HALF:, :]                 # (200, 128) "new" features

        # k = 0 initialises the partial sum (no zero-fill + add pass).
        z = jnp.maximum(xo * ao_ref[0] + xn * an_ref[0] + c_ref[0], 0.0)
        y = jnp.sum(z * w2_ref[0], axis=0, keepdims=True)            # (1, 128)
        for k in range(1, hidden):
            z = jnp.maximum(xo * ao_ref[k] + xn * an_ref[k] + c_ref[k], 0.0)
            y = y + jnp.sum(z * w2_ref[k], axis=0, keepdims=True)

        out_ref[j] = jax.nn.sigmoid(y + b2)                           # lane-dense
        return carry

    jax.lax.fori_loop(0, num_chunks, chunk_body, 0)


def fcn_combo_forward(x, gamma, beta, rmean, rvar, w1, b1, w2, b2,
                      *, batch_tile=BATCH_TILE):
    N, F = x.shape
    assert F == INPUT_SIZE, F
    H = w1.shape[0]
    f32 = jnp.float32
    x = x.astype(f32)

    # Batch tile: multiple of the 128-lane chunk, capped at ceil(N/2) so the
    # grid keeps >= 2 "parallel" tiles (v7x 2-TC sharding) when N allows.
    bt = min(int(batch_tile), max(LANE_CHUNK, _round_up(-(-N // 2), LANE_CHUNK)))
    bt = _round_up(bt, LANE_CHUNK)
    n_pad = _round_up(N, bt)
    if n_pad != N:
        x = jnp.pad(x, ((0, n_pad - N), (0, 0)))
    num_tiles = n_pad // bt
    num_chunks = bt // LANE_CHUNK

    # Feature-on-sublane layout: (batch_chunk, feature, lane = row-within-chunk).
    x_c = x.reshape(n_pad // LANE_CHUNK, LANE_CHUNK, INPUT_SIZE).transpose(0, 2, 1)

    # Fold BatchNorm (inference) + fc1 weights into per-hidden-unit planes.
    scale = gamma.astype(f32) * jax.lax.rsqrt(rvar.astype(f32) + EPS)
    shift = beta.astype(f32) - rmean.astype(f32) * scale
    w1a = w1[:, 0].astype(f32)[:, None]                              # (H, 1)
    w1b = w1[:, 1].astype(f32)[:, None]                              # (H, 1)
    a_o = w1a * scale[:HALF][None, :]                                # (H, 200)
    a_n = w1b * scale[HALF:][None, :]                                # (H, 200)
    c_p = (w1a * shift[:HALF][None, :] + w1b * shift[HALF:][None, :]
           + b1.astype(f32)[:, None])                                # (H, 200)
    # fc2 weights regrouped so w2r[k, f] == fc2.weight[0, f*H + k].
    w2r = jnp.transpose(w2.astype(f32).reshape(HALF, H), (1, 0))     # (H, 200)
    b2v = b2.reshape(1).astype(f32)

    def rep(v):  # replicate across the 128-lane batch axis
        return jnp.broadcast_to(v[:, :, None], (H, HALF, LANE_CHUNK)).astype(f32)

    coef_spec = pl.BlockSpec((H, HALF, LANE_CHUNK), lambda i: (0, 0, 0))
    smem_spec = pl.BlockSpec(memory_space=pltpu.MemorySpace.SMEM)

    out = pl.pallas_call(
        functools.partial(_fcn_combo_kernel, H, num_chunks),
        out_shape=jax.ShapeDtypeStruct((n_pad // LANE_CHUNK, 1, LANE_CHUNK), f32),
        grid=(num_tiles,),
        in_specs=[
            pl.BlockSpec((num_chunks, INPUT_SIZE, LANE_CHUNK), lambda i: (i, 0, 0)),
            coef_spec,   # A_o
            coef_spec,   # A_n
            coef_spec,   # C
            coef_spec,   # W2 (regrouped)
            smem_spec,   # fc2.bias
        ],
        out_specs=pl.BlockSpec((num_chunks, 1, LANE_CHUNK), lambda i: (i, 0, 0)),
        compiler_params=pltpu.CompilerParams(
            dimension_semantics=("parallel",),
            vmem_limit_bytes=32 * 1024 * 1024),
    )(x_c, rep(a_o), rep(a_n), rep(c_p), rep(w2r), b2v)

    return out.reshape(-1)[:N]


def reference_forward(x, gamma, beta, rmean, rvar, w1, b1, w2, b2):
    """Pure-JAX mirror of FCN_COMBO.forward (eval-mode BN) for verification."""
    xb = (x - rmean) / jnp.sqrt(rvar + EPS) * gamma + beta
    pairs = jnp.stack([xb[:, :HALF], xb[:, HALF:]], axis=2)        # (N, 200, 2)
    h = jax.nn.relu(pairs @ w1.T + b1)                             # (N, 200, H)
    flat = h.reshape(x.shape[0], -1)                               # (N, 200*H)
    return jax.nn.sigmoid(flat @ w2.T + b2).reshape(-1)


if __name__ == "__main__":
    key = jax.random.PRNGKey(0)
    ks = jax.random.split(key, 10)
    H = HIDDEN

    gamma = 1.0 + 0.1 * jax.random.normal(ks[1], (INPUT_SIZE,), jnp.float32)
    beta = 0.1 * jax.random.normal(ks[2], (INPUT_SIZE,), jnp.float32)
    rmean = 0.1 * jax.random.normal(ks[3], (INPUT_SIZE,), jnp.float32)
    rvar = jax.random.uniform(ks[4], (INPUT_SIZE,), jnp.float32, minval=0.5, maxval=1.5)
    w1 = jax.random.normal(ks[5], (H, 2), jnp.float32) / jnp.sqrt(2.0)
    b1 = 0.1 * jax.random.normal(ks[6], (H,), jnp.float32)
    w2 = jax.random.normal(ks[7], (1, HALF * H), jnp.float32) / jnp.sqrt(float(HALF * H))
    b2 = 0.1 * jax.random.normal(ks[8], (1,), jnp.float32)

    # Small batch: single tile, single in-kernel chunk (bt = 128).
    x_small = jax.random.normal(ks[0], (16, INPUT_SIZE), jnp.float32)
    out_small = jax.block_until_ready(
        fcn_combo_forward(x_small, gamma, beta, rmean, rvar, w1, b1, w2, b2))
    ref_small = reference_forward(x_small, gamma, beta, rmean, rvar, w1, b1, w2, b2)
    assert out_small.shape == (16,), out_small.shape
    assert jnp.allclose(out_small, ref_small, atol=1e-5, rtol=1e-4)

    # Non-multiple batch: exercises padding, 2 grid tiles (bt = 512) and the
    # 4-chunk in-kernel fori_loop over 128-lane batch slices.
    x_big = jax.random.normal(ks[9], (1000, INPUT_SIZE), jnp.float32)
    out_big = jax.block_until_ready(
        fcn_combo_forward(x_big, gamma, beta, rmean, rvar, w1, b1, w2, b2))
    ref_big = reference_forward(x_big, gamma, beta, rmean, rvar, w1, b1, w2, b2)
    assert out_big.shape == (1000,), out_big.shape
    assert jnp.allclose(out_big, ref_big, atol=1e-5, rtol=1e-4)

    print("KERNEL_OK")
</pallas_src>

<mosaic_0001>
module attributes {stable_mosaic.version = 11 : i64} {
  func.func @_fcn_combo_kernel(%arg0: i32, %arg1: memref<1x400x128xf32, #tpu.memory_space<vmem>>, %arg2: memref<8x200x128xf32, #tpu.memory_space<vmem>>, %arg3: memref<8x200x128xf32, #tpu.memory_space<vmem>>, %arg4: memref<8x200x128xf32, #tpu.memory_space<vmem>>, %arg5: memref<8x200x128xf32, #tpu.memory_space<vmem>>, %arg6: memref<1xf32, #tpu.memory_space<smem>>, %arg7: memref<1x1x128xf32, #tpu.memory_space<vmem>>) attributes {dimension_semantics = [#tpu.dimension_semantics<parallel>], iteration_bounds = array<i64: 1>, scalar_prefetch = 0 : i64, scratch_operands = 0 : i64, tpu.core_type = #tpu.core_type<tc>, window_params = [{transform_indices = @transform_0, window_bounds = array<i64: 1, 400, 128>}, {pipeline_mode = #tpu.pipeline_mode<synchronous>, transform_indices = @transform_1, window_bounds = array<i64: 8, 200, 128>}, {pipeline_mode = #tpu.pipeline_mode<synchronous>, transform_indices = @transform_2, window_bounds = array<i64: 8, 200, 128>}, {pipeline_mode = #tpu.pipeline_mode<synchronous>, transform_indices = @transform_3, window_bounds = array<i64: 8, 200, 128>}, {pipeline_mode = #tpu.pipeline_mode<synchronous>, transform_indices = @transform_4, window_bounds = array<i64: 8, 200, 128>}, {transform_indices = @transform_5, window_bounds = array<i64: 1>}, {transform_indices = @transform_6, window_bounds = array<i64: 1, 1, 128>}]} {
    %c0 = arith.constant 0 : index
    %0 = memref.load %arg6[%c0] : memref<1xf32, #tpu.memory_space<smem>>
    %c0_i32 = arith.constant 0 : i32
    %1 = arith.index_cast %c0_i32 : i32 to index
    %c0_0 = arith.constant 0 : index
    %c0_1 = arith.constant 0 : index
    %2 = vector.load %arg1[%1, %c0_0, %c0_1] : memref<1x400x128xf32, #tpu.memory_space<vmem>>, vector<1x400x128xf32>
    %3 = vector.shape_cast %2 : vector<1x400x128xf32> to vector<400x128xf32>
    %4 = vector.extract_strided_slice %3 {offsets = [0, 0], sizes = [200, 128], strides = [1, 1]} : vector<400x128xf32> to vector<200x128xf32>
    %5 = vector.extract_strided_slice %3 {offsets = [200, 0], sizes = [200, 128], strides = [1, 1]} : vector<400x128xf32> to vector<200x128xf32>
    %c0_2 = arith.constant 0 : index
    %c0_3 = arith.constant 0 : index
    %c0_4 = arith.constant 0 : index
    %6 = vector.load %arg2[%c0_2, %c0_3, %c0_4] : memref<8x200x128xf32, #tpu.memory_space<vmem>>, vector<1x200x128xf32>
    %7 = vector.shape_cast %6 : vector<1x200x128xf32> to vector<200x128xf32>
    %8 = arith.mulf %4, %7 : vector<200x128xf32>
    %c0_5 = arith.constant 0 : index
    %c0_6 = arith.constant 0 : index
    %c0_7 = arith.constant 0 : index
    %9 = vector.load %arg3[%c0_5, %c0_6, %c0_7] : memref<8x200x128xf32, #tpu.memory_space<vmem>>, vector<1x200x128xf32>
    %10 = vector.shape_cast %9 : vector<1x200x128xf32> to vector<200x128xf32>
    %11 = arith.mulf %5, %10 : vector<200x128xf32>
    %12 = arith.addf %8, %11 : vector<200x128xf32>
    %c0_8 = arith.constant 0 : index
    %c0_9 = arith.constant 0 : index
    %c0_10 = arith.constant 0 : index
    %13 = vector.load %arg4[%c0_8, %c0_9, %c0_10] : memref<8x200x128xf32, #tpu.memory_space<vmem>>, vector<1x200x128xf32>
    %14 = vector.shape_cast %13 : vector<1x200x128xf32> to vector<200x128xf32>
    %15 = arith.addf %12, %14 : vector<200x128xf32>
    %cst = arith.constant 0.000000e+00 : f32
    %16 = vector.broadcast %cst : f32 to vector<200x128xf32>
    %17 = arith.maximumf %15, %16 : vector<200x128xf32>
    %c0_11 = arith.constant 0 : index
    %c0_12 = arith.constant 0 : index
    %c0_13 = arith.constant 0 : index
    %18 = vector.load %arg5[%c0_11, %c0_12, %c0_13] : memref<8x200x128xf32, #tpu.memory_space<vmem>>, vector<1x200x128xf32>
    %19 = vector.shape_cast %18 : vector<1x200x128xf32> to vector<200x128xf32>
    %20 = arith.mulf %17, %19 : vector<200x128xf32>
    %cst_14 = arith.constant dense<0.000000e+00> : vector<128xf32>
    %21 = vector.multi_reduction <add>, %20, %cst_14 [0] : vector<200x128xf32> to vector<128xf32>
    %22 = vector.shape_cast %21 : vector<128xf32> to vector<1x128xf32>
    %c1 = arith.constant 1 : index
    %c0_15 = arith.constant 0 : index
    %c0_16 = arith.constant 0 : index
    %23 = vector.load %arg2[%c1, %c0_15, %c0_16] : memref<8x200x128xf32, #tpu.memory_space<vmem>>, vector<1x200x128xf32>
    %24 = vector.shape_cast %23 : vector<1x200x128xf32> to vector<200x128xf32>
    %25 = arith.mulf %4, %24 : vector<200x128xf32>
    %c1_17 = arith.constant 1 : index
    %c0_18 = arith.constant 0 : index
    %c0_19 = arith.constant 0 : index
    %26 = vector.load %arg3[%c1_17, %c0_18, %c0_19] : memref<8x200x128xf32, #tpu.memory_space<vmem>>, vector<1x200x128xf32>
    %27 = vector.shape_cast %26 : vector<1x200x128xf32> to vector<200x128xf32>
    %28 = arith.mulf %5, %27 : vector<200x128xf32>
    %29 = arith.addf %25, %28 : vector<200x128xf32>
    %c1_20 = arith.constant 1 : index
    %c0_21 = arith.constant 0 : index
    %c0_22 = arith.constant 0 : index
    %30 = vector.load %arg4[%c1_20, %c0_21, %c0_22] : memref<8x200x128xf32, #tpu.memory_space<vmem>>, vector<1x200x128xf32>
    %31 = vector.shape_cast %30 : vector<1x200x128xf32> to vector<200x128xf32>
    %32 = arith.addf %29, %31 : vector<200x128xf32>
    %cst_23 = arith.constant 0.000000e+00 : f32
    %33 = vector.broadcast %cst_23 : f32 to vector<200x128xf32>
    %34 = arith.maximumf %32, %33 : vector<200x128xf32>
    %c1_24 = arith.constant 1 : index
    %c0_25 = arith.constant 0 : index
    %c0_26 = arith.constant 0 : index
    %35 = vector.load %arg5[%c1_24, %c0_25, %c0_26] : memref<8x200x128xf32, #tpu.memory_space<vmem>>, vector<1x200x128xf32>
    %36 = vector.shape_cast %35 : vector<1x200x128xf32> to vector<200x128xf32>
    %37 = arith.mulf %34, %36 : vector<200x128xf32>
    %cst_27 = arith.constant dense<0.000000e+00> : vector<128xf32>
    %38 = vector.multi_reduction <add>, %37, %cst_27 [0] : vector<200x128xf32> to vector<128xf32>
    %39 = vector.shape_cast %38 : vector<128xf32> to vector<1x128xf32>
    %40 = arith.addf %22, %39 : vector<1x128xf32>
    %c2 = arith.constant 2 : index
    %c0_28 = arith.constant 0 : index
    %c0_29 = arith.constant 0 : index
    %41 = vector.load %arg2[%c2, %c0_28, %c0_29] : memref<8x200x128xf32, #tpu.memory_space<vmem>>, vector<1x200x128xf32>
    %42 = vector.shape_cast %41 : vector<1x200x128xf32> to vector<200x128xf32>
    %43 = arith.mulf %4, %42 : vector<200x128xf32>
    %c2_30 = arith.constant 2 : index
    %c0_31 = arith.constant 0 : index
    %c0_32 = arith.constant 0 : index
    %44 = vector.load %arg3[%c2_30, %c0_31, %c0_32] : memref<8x200x128xf32, #tpu.memory_space<vmem>>, vector<1x200x128xf32>
    %45 = vector.shape_cast %44 : vector<1x200x128xf32> to vector<200x128xf32>
    %46 = arith.mulf %5, %45 : vector<200x128xf32>
    %47 = arith.addf %43, %46 : vector<200x128xf32>
    %c2_33 = arith.constant 2 : index
    %c0_34 = arith.constant 0 : index
    %c0_35 = arith.constant 0 : index
    %48 = vector.load %arg4[%c2_33, %c0_34, %c0_35] : memref<8x200x128xf32, #tpu.memory_space<vmem>>, vector<1x200x128xf32>
    %49 = vector.shape_cast %48 : vector<1x200x128xf32> to vector<200x128xf32>
    %50 = arith.addf %47, %49 : vector<200x128xf32>
    %cst_36 = arith.constant 0.000000e+00 : f32
    %51 = vector.broadcast %cst_36 : f32 to vector<200x128xf32>
    %52 = arith.maximumf %50, %51 : vector<200x128xf32>
    %c2_37 = arith.constant 2 : index
    %c0_38 = arith.constant 0 : index
    %c0_39 = arith.constant 0 : index
    %53 = vector.load %arg5[%c2_37, %c0_38, %c0_39] : memref<8x200x128xf32, #tpu.memory_space<vmem>>, vector<1x200x128xf32>
    %54 = vector.shape_cast %53 : vector<1x200x128xf32> to vector<200x128xf32>
    %55 = arith.mulf %52, %54 : vector<200x128xf32>
    %cst_40 = arith.constant dense<0.000000e+00> : vector<128xf32>
    %56 = vector.multi_reduction <add>, %55, %cst_40 [0] : vector<200x128xf32> to vector<128xf32>
    %57 = vector.shape_cast %56 : vector<128xf32> to vector<1x128xf32>
    %58 = arith.addf %40, %57 : vector<1x128xf32>
    %c3 = arith.constant 3 : index
    %c0_41 = arith.constant 0 : index
    %c0_42 = arith.constant 0 : index
    %59 = vector.load %arg2[%c3, %c0_41, %c0_42] : memref<8x200x128xf32, #tpu.memory_space<vmem>>, vector<1x200x128xf32>
    %60 = vector.shape_cast %59 : vector<1x200x128xf32> to vector<200x128xf32>
    %61 = arith.mulf %4, %60 : vector<200x128xf32>
    %c3_43 = arith.constant 3 : index
    %c0_44 = arith.constant 0 : index
    %c0_45 = arith.constant 0 : index
    %62 = vector.load %arg3[%c3_43, %c0_44, %c0_45] : memref<8x200x128xf32, #tpu.memory_space<vmem>>, vector<1x200x128xf32>
    %63 = vector.shape_cast %62 : vector<1x200x128xf32> to vector<200x128xf32>
    %64 = arith.mulf %5, %63 : vector<200x128xf32>
    %65 = arith.addf %61, %64 : vector<200x128xf32>
    %c3_46 = arith.constant 3 : index
    %c0_47 = arith.constant 0 : index
    %c0_48 = arith.constant 0 : index
    %66 = vector.load %arg4[%c3_46, %c0_47, %c0_48] : memref<8x200x128xf32, #tpu.memory_space<vmem>>, vector<1x200x128xf32>
    %67 = vector.shape_cast %66 : vector<1x200x128xf32> to vector<200x128xf32>
    %68 = arith.addf %65, %67 : vector<200x128xf32>
    %cst_49 = arith.constant 0.000000e+00 : f32
    %69 = vector.broadcast %cst_49 : f32 to vector<200x128xf32>
    %70 = arith.maximumf %68, %69 : vector<200x128xf32>
    %c3_50 = arith.constant 3 : index
    %c0_51 = arith.constant 0 : index
    %c0_52 = arith.constant 0 : index
    %71 = vector.load %arg5[%c3_50, %c0_51, %c0_52] : memref<8x200x128xf32, #tpu.memory_space<vmem>>, vector<1x200x128xf32>
    %72 = vector.shape_cast %71 : vector<1x200x128xf32> to vector<200x128xf32>
    %73 = arith.mulf %70, %72 : vector<200x128xf32>
    %cst_53 = arith.constant dense<0.000000e+00> : vector<128xf32>
    %74 = vector.multi_reduction <add>, %73, %cst_53 [0] : vector<200x128xf32> to vector<128xf32>
    %75 = vector.shape_cast %74 : vector<128xf32> to vector<1x128xf32>
    %76 = arith.addf %58, %75 : vector<1x128xf32>
    %c4 = arith.constant 4 : index
    %c0_54 = arith.constant 0 : index
    %c0_55 = arith.constant 0 : index
    %77 = vector.load %arg2[%c4, %c0_54, %c0_55] : memref<8x200x128xf32, #tpu.memory_space<vmem>>, vector<1x200x128xf32>
    %78 = vector.shape_cast %77 : vector<1x200x128xf32> to vector<200x128xf32>
    %79 = arith.mulf %4, %78 : vector<200x128xf32>
    %c4_56 = arith.constant 4 : index
    %c0_57 = arith.constant 0 : index
    %c0_58 = arith.constant 0 : index
    %80 = vector.load %arg3[%c4_56, %c0_57, %c0_58] : memref<8x200x128xf32, #tpu.memory_space<vmem>>, vector<1x200x128xf32>
    %81 = vector.shape_cast %80 : vector<1x200x128xf32> to vector<200x128xf32>
    %82 = arith.mulf %5, %81 : vector<200x128xf32>
    %83 = arith.addf %79, %82 : vector<200x128xf32>
    %c4_59 = arith.constant 4 : index
    %c0_60 = arith.constant 0 : index
    %c0_61 = arith.constant 0 : index
    %84 = vector.load %arg4[%c4_59, %c0_60, %c0_61] : memref<8x200x128xf32, #tpu.memory_space<vmem>>, vector<1x200x128xf32>
    %85 = vector.shape_cast %84 : vector<1x200x128xf32> to vector<200x128xf32>
    %86 = arith.addf %83, %85 : vector<200x128xf32>
    %cst_62 = arith.constant 0.000000e+00 : f32
    %87 = vector.broadcast %cst_62 : f32 to vector<200x128xf32>
    %88 = arith.maximumf %86, %87 : vector<200x128xf32>
    %c4_63 = arith.constant 4 : index
    %c0_64 = arith.constant 0 : index
    %c0_65 = arith.constant 0 : index
    %89 = vector.load %arg5[%c4_63, %c0_64, %c0_65] : memref<8x200x128xf32, #tpu.memory_space<vmem>>, vector<1x200x128xf32>
    %90 = vector.shape_cast %89 : vector<1x200x128xf32> to vector<200x128xf32>
    %91 = arith.mulf %88, %90 : vector<200x128xf32>
    %cst_66 = arith.constant dense<0.000000e+00> : vector<128xf32>
    %92 = vector.multi_reduction <add>, %91, %cst_66 [0] : vector<200x128xf32> to vector<128xf32>
    %93 = vector.shape_cast %92 : vector<128xf32> to vector<1x128xf32>
    %94 = arith.addf %76, %93 : vector<1x128xf32>
    %c5 = arith.constant 5 : index
    %c0_67 = arith.constant 0 : index
    %c0_68 = arith.constant 0 : index
    %95 = vector.load %arg2[%c5, %c0_67, %c0_68] : memref<8x200x128xf32, #tpu.memory_space<vmem>>, vector<1x200x128xf32>
    %96 = vector.shape_cast %95 : vector<1x200x128xf32> to vector<200x128xf32>
    %97 = arith.mulf %4, %96 : vector<200x128xf32>
    %c5_69 = arith.constant 5 : index
    %c0_70 = arith.constant 0 : index
    %c0_71 = arith.constant 0 : index
    %98 = vector.load %arg3[%c5_69, %c0_70, %c0_71] : memref<8x200x128xf32, #tpu.memory_space<vmem>>, vector<1x200x128xf32>
    %99 = vector.shape_cast %98 : vector<1x200x128xf32> to vector<200x128xf32>
    %100 = arith.mulf %5, %99 : vector<200x128xf32>
    %101 = arith.addf %97, %100 : vector<200x128xf32>
    %c5_72 = arith.constant 5 : index
    %c0_73 = arith.constant 0 : index
    %c0_74 = arith.constant 0 : index
    %102 = vector.load %arg4[%c5_72, %c0_73, %c0_74] : memref<8x200x128xf32, #tpu.memory_space<vmem>>, vector<1x200x128xf32>
    %103 = vector.shape_cast %102 : vector<1x200x128xf32> to vector<200x128xf32>
    %104 = arith.addf %101, %103 : vector<200x128xf32>
    %cst_75 = arith.constant 0.000000e+00 : f32
    %105 = vector.broadcast %cst_75 : f32 to vector<200x128xf32>
    %106 = arith.maximumf %104, %105 : vector<200x128xf32>
    %c5_76 = arith.constant 5 : index
    %c0_77 = arith.constant 0 : index
    %c0_78 = arith.constant 0 : index
    %107 = vector.load %arg5[%c5_76, %c0_77, %c0_78] : memref<8x200x128xf32, #tpu.memory_space<vmem>>, vector<1x200x128xf32>
    %108 = vector.shape_cast %107 : vector<1x200x128xf32> to vector<200x128xf32>
    %109 = arith.mulf %106, %108 : vector<200x128xf32>
    %cst_79 = arith.constant dense<0.000000e+00> : vector<128xf32>
    %110 = vector.multi_reduction <add>, %109, %cst_79 [0] : vector<200x128xf32> to vector<128xf32>
    %111 = vector.shape_cast %110 : vector<128xf32> to vector<1x128xf32>
    %112 = arith.addf %94, %111 : vector<1x128xf32>
    %c6 = arith.constant 6 : index
    %c0_80 = arith.constant 0 : index
    %c0_81 = arith.constant 0 : index
    %113 = vector.load %arg2[%c6, %c0_80, %c0_81] : memref<8x200x128xf32, #tpu.memory_space<vmem>>, vector<1x200x128xf32>
    %114 = vector.shape_cast %113 : vector<1x200x128xf32> to vector<200x128xf32>
    %115 = arith.mulf %4, %114 : vector<200x128xf32>
    %c6_82 = arith.constant 6 : index
    %c0_83 = arith.constant 0 : index
    %c0_84 = arith.constant 0 : index
    %116 = vector.load %arg3[%c6_82, %c0_83, %c0_84] : memref<8x200x128xf32, #tpu.memory_space<vmem>>, vector<1x200x128xf32>
    %117 = vector.shape_cast %116 : vector<1x200x128xf32> to vector<200x128xf32>
    %118 = arith.mulf %5, %117 : vector<200x128xf32>
    %119 = arith.addf %115, %118 : vector<200x128xf32>
    %c6_85 = arith.constant 6 : index
    %c0_86 = arith.constant 0 : index
    %c0_87 = arith.constant 0 : index
    %120 = vector.load %arg4[%c6_85, %c0_86, %c0_87] : memref<8x200x128xf32, #tpu.memory_space<vmem>>, vector<1x200x128xf32>
    %121 = vector.shape_cast %120 : vector<1x200x128xf32> to vector<200x128xf32>
    %122 = arith.addf %119, %121 : vector<200x128xf32>
    %cst_88 = arith.constant 0.000000e+00 : f32
    %123 = vector.broadcast %cst_88 : f32 to vector<200x128xf32>
    %124 = arith.maximumf %122, %123 : vector<200x128xf32>
    %c6_89 = arith.constant 6 : index
    %c0_90 = arith.constant 0 : index
    %c0_91 = arith.constant 0 : index
    %125 = vector.load %arg5[%c6_89, %c0_90, %c0_91] : memref<8x200x128xf32, #tpu.memory_space<vmem>>, vector<1x200x128xf32>
    %126 = vector.shape_cast %125 : vector<1x200x128xf32> to vector<200x128xf32>
    %127 = arith.mulf %124, %126 : vector<200x128xf32>
    %cst_92 = arith.constant dense<0.000000e+00> : vector<128xf32>
    %128 = vector.multi_reduction <add>, %127, %cst_92 [0] : vector<200x128xf32> to vector<128xf32>
    %129 = vector.shape_cast %128 : vector<128xf32> to vector<1x128xf32>
    %130 = arith.addf %112, %129 : vector<1x128xf32>
    %c7 = arith.constant 7 : index
    %c0_93 = arith.constant 0 : index
    %c0_94 = arith.constant 0 : index
    %131 = vector.load %arg2[%c7, %c0_93, %c0_94] : memref<8x200x128xf32, #tpu.memory_space<vmem>>, vector<1x200x128xf32>
    %132 = vector.shape_cast %131 : vector<1x200x128xf32> to vector<200x128xf32>
    %133 = arith.mulf %4, %132 : vector<200x128xf32>
    %c7_95 = arith.constant 7 : index
    %c0_96 = arith.constant 0 : index
    %c0_97 = arith.constant 0 : index
    %134 = vector.load %arg3[%c7_95, %c0_96, %c0_97] : memref<8x200x128xf32, #tpu.memory_space<vmem>>, vector<1x200x128xf32>
    %135 = vector.shape_cast %134 : vector<1x200x128xf32> to vector<200x128xf32>
    %136 = arith.mulf %5, %135 : vector<200x128xf32>
    %137 = arith.addf %133, %136 : vector<200x128xf32>
    %c7_98 = arith.constant 7 : index
    %c0_99 = arith.constant 0 : index
    %c0_100 = arith.constant 0 : index
    %138 = vector.load %arg4[%c7_98, %c0_99, %c0_100] : memref<8x200x128xf32, #tpu.memory_space<vmem>>, vector<1x200x128xf32>
    %139 = vector.shape_cast %138 : vector<1x200x128xf32> to vector<200x128xf32>
    %140 = arith.addf %137, %139 : vector<200x128xf32>
    %cst_101 = arith.constant 0.000000e+00 : f32
    %141 = vector.broadcast %cst_101 : f32 to vector<200x128xf32>
    %142 = arith.maximumf %140, %141 : vector<200x128xf32>
    %c7_102 = arith.constant 7 : index
    %c0_103 = arith.constant 0 : index
    %c0_104 = arith.constant 0 : index
    %143 = vector.load %arg5[%c7_102, %c0_103, %c0_104] : memref<8x200x128xf32, #tpu.memory_space<vmem>>, vector<1x200x128xf32>
    %144 = vector.shape_cast %143 : vector<1x200x128xf32> to vector<200x128xf32>
    %145 = arith.mulf %142, %144 : vector<200x128xf32>
    %cst_105 = arith.constant dense<0.000000e+00> : vector<128xf32>
    %146 = vector.multi_reduction <add>, %145, %cst_105 [0] : vector<200x128xf32> to vector<128xf32>
    %147 = vector.shape_cast %146 : vector<128xf32> to vector<1x128xf32>
    %148 = arith.addf %130, %147 : vector<1x128xf32>
    %149 = vector.broadcast %0 : f32 to vector<1x128xf32>
    %150 = arith.addf %148, %149 : vector<1x128xf32>
    %151 = arith.negf %150 : vector<1x128xf32>
    %152 = math.exp %151 : vector<1x128xf32>
    %cst_106 = arith.constant 1.000000e+00 : f32
    %153 = vector.broadcast %cst_106 : f32 to vector<1x128xf32>
    %154 = arith.addf %153, %152 : vector<1x128xf32>
    %155 = arith.divf %153, %154 : vector<1x128xf32>
    %156 = arith.index_cast %c0_i32 : i32 to index
    %c0_107 = arith.constant 0 : index
    %c0_108 = arith.constant 0 : index
    %157 = vector.load %arg7[%156, %c0_107, %c0_108] : memref<1x1x128xf32, #tpu.memory_space<vmem>>, vector<1x1x128xf32>
    %158 = vector.shape_cast %157 : vector<1x1x128xf32> to vector<1x128xf32>
    %159 = vector.shape_cast %155 : vector<1x128xf32> to vector<1x1x128xf32>
    tpu.vector_store %arg7[%156, %c0_107, %c0_108], %159 {strides = array<i32>} : memref<1x1x128xf32, #tpu.memory_space<vmem>>, vector<1x1x128xf32>,
    %c1_i32 = arith.constant 1 : i32
    return
  }
  func.func @transform_0(%arg0: i32) -> (i32, i32, i32) {
    %c0_i32 = arith.constant 0 : i32
    %c0_i32_0 = arith.constant 0 : i32
    %c0_i32_1 = arith.constant 0 : i32
    return %arg0, %c0_i32, %c0_i32_0 : i32, i32, i32
  }
  func.func @transform_1(%arg0: i32) -> (i32, i32, i32) {
    %c0_i32 = arith.constant 0 : i32
    %c0_i32_0 = arith.constant 0 : i32
    %c0_i32_1 = arith.constant 0 : i32
    %c0_i32_2 = arith.constant 0 : i32
    return %c0_i32, %c0_i32_0, %c0_i32_1 : i32, i32, i32
  }
  func.func @transform_2(%arg0: i32) -> (i32, i32, i32) {
    %c0_i32 = arith.constant 0 : i32
    %c0_i32_0 = arith.constant 0 : i32
    %c0_i32_1 = arith.constant 0 : i32
    %c0_i32_2 = arith.constant 0 : i32
    return %c0_i32, %c0_i32_0, %c0_i32_1 : i32, i32, i32
  }
  func.func @transform_3(%arg0: i32) -> (i32, i32, i32) {
    %c0_i32 = arith.constant 0 : i32
    %c0_i32_0 = arith.constant 0 : i32
    %c0_i32_1 = arith.constant 0 : i32
    %c0_i32_2 = arith.constant 0 : i32
    return %c0_i32, %c0_i32_0, %c0_i32_1 : i32, i32, i32
  }
  func.func @transform_4(%arg0: i32) -> (i32, i32, i32) {
    %c0_i32 = arith.constant 0 : i32
    %c0_i32_0 = arith.constant 0 : i32
    %c0_i32_1 = arith.constant 0 : i32
    %c0_i32_2 = arith.constant 0 : i32
    return %c0_i32, %c0_i32_0, %c0_i32_1 : i32, i32, i32
  }
  func.func @transform_5(%arg0: i32) -> i32 {
    %c0_i32 = arith.constant 0 : i32
    %c0_i32_0 = arith.constant 0 : i32
    return %c0_i32 : i32
  }
  func.func @transform_6(%arg0: i32) -> (i32, i32, i32) {
    %c0_i32 = arith.constant 0 : i32
    %c0_i32_0 = arith.constant 0 : i32
    %c0_i32_1 = arith.constant 0 : i32
    return %arg0, %c0_i32, %c0_i32_0 : i32, i32, i32
  }
}

</mosaic_0001>

<llo_original>
// kernel: tpu_custom_call.1
$region0: #{tpu_custom_call.1}
  #allocation0 [shape = 'u32[]', space=smem, size = 0x4, offset = 0x4, fixed_abs, tag = 'smem constant byte address 0x4 - core index']
  #allocation1 [shape = 'u32[144,128]{1,0:T(1,128)}', space=vmem, size = 0x12000, scoped, tag = 'internal scratch']
  #allocation2 [shape = 'f32[1]{0:T(128)S(6)}', space=smem, size = 0x200, scoped, tag = 'scoped memory for tpu_custom_call.1']
  %s0 = inlined_call_operand.hbm [shape: f32[1,400,128], index: 0, kind: input, shape index: {}]
  %s1 = inlined_call_operand.hbm [shape: f32[8,200,128], index: 1, kind: input, shape index: {}]
  %s2 = inlined_call_operand.hbm [shape: f32[8,200,128], index: 2, kind: input, shape index: {}]
  %s3 = inlined_call_operand.hbm [shape: f32[8,200,128], index: 3, kind: input, shape index: {}]
  %s4 = inlined_call_operand.hbm [shape: f32[8,200,128], index: 4, kind: input, shape index: {}]
  %s5 = inlined_call_operand.<no memory space> [shape: f32[1], index: 5, kind: input, shape index: {}]
  %s6 = inlined_call_operand.hbm [shape: f32[1,1,128], index: 6, kind: output, shape index: {}]
  %s7 = sld [smem:[#allocation0]]
  $region54: #{tpu_custom_call.1} parent=0
    _
  %s9 = ssub.s32 1, %s7
  %s10 = scalar_select 0, %s9, %s7
  %11 = sst [smem:[#allocation2]] %s5
  $region1: #{tpu_custom_call.1} parent=0
    #allocation3 [shape = 'u8[204800]{0}', space=vmem, size = 0x32000, scoped, tag = 'input window, operand 0, single buffered']
    #allocation4 [shape = 's32[1]{0}', space=sflag, size = 0x4, scoped, tag = 'scoped memory for tpu_custom_call.1']
    #allocation5 [shape = 's32[1]{0}', space=sflag, size = 0x4, scoped, tag = 'scoped memory for tpu_custom_call.1']
    #allocation6 [shape = 'u8[819200]{0}', space=vmem, size = 0xc8000, scoped, tag = 'input window, operand 1, single buffered']
    #allocation7 [shape = 's32[1]{0}', space=sflag, size = 0x4, scoped, tag = 'scoped memory for tpu_custom_call.1']
    #allocation8 [shape = 'u8[819200]{0}', space=vmem, size = 0xc8000, scoped, tag = 'input window, operand 2, single buffered']
    #allocation9 [shape = 'u8[819200]{0}', space=vmem, size = 0xc8000, scoped, tag = 'input window, operand 3, single buffered']
    #allocation10 [shape = 's32[1]{0}', space=sflag, size = 0x4, scoped, tag = 'scoped memory for tpu_custom_call.1']
    #allocation11 [shape = 'u8[819200]{0}', space=vmem, size = 0xc8000, scoped, tag = 'input window, operand 4, single buffered']
    #allocation12 [shape = 'u8[512]{0}', space=vmem, size = 0x400, scoped, tag = 'output window, operand 0, single buffered']
    %12 = vsyncpa [#allocation4], 0
    %13 = vsyncpa [#allocation7], 0
    %14 = vsyncpa [#allocation10], 0
    %15 = vsyncpa [#allocation5], 0
    // Predicated region
    $region2: #{tpu_custom_call.1} parent=1 // pred_check
      _
    $region3: #{tpu_custom_call.1} parent=1 // pred_check_branch
      %17 = sbr.rel (0) target = $region5
    $region4: #{tpu_custom_call.1} parent=1 // pred_region
      %s19 = ssub.s32 6400, 6400
      %20 = vsyncadd [#allocation4], %s19
      %s21 = sshll.u32 [#allocation3], 4
      %s22 = int_to_ptr.vmem [resolvable:$true] %s21
      %27 = dma.hbm_to_vmem [thread:$0]  %s0, 6400, %s22, [#allocation4], 128, 128, 8
    $region5: #{tpu_custom_call.1} parent=1 // pred_fallthru
      _
    // Predicated region
    $region6: #{tpu_custom_call.1} parent=1 // pred_check
      _
    $region7: #{tpu_custom_call.1} parent=1 // pred_check_branch
      %29 = sbr.rel (0) target = $region9
    $region8: #{tpu_custom_call.1} parent=1 // pred_region
      %s31 = ssub.s32 25600, 25600
      %32 = vsyncadd [#allocation7], %s31
      %s33 = sshll.u32 [#allocation6], 4
      %s34 = int_to_ptr.vmem [resolvable:$true] %s33
      %39 = dma.hbm_to_vmem [thread:$0]  %s1, 25600, %s34, [#allocation7], 128, 128, 8
    $region9: #{tpu_custom_call.1} parent=1 // pred_fallthru
      _
    // Predicated region
    $region10: #{tpu_custom_call.1} parent=1 // pred_check
      _
    $region11: #{tpu_custom_call.1} parent=1 // pred_check_branch
      %41 = sbr.rel (0) target = $region13
    $region12: #{tpu_custom_call.1} parent=1 // pred_region
      %s43 = ssub.s32 25600, 25600
      %44 = vsyncadd [#allocation7], %s43
      %s45 = sshll.u32 [#allocation8], 4
      %s46 = int_to_ptr.vmem [resolvable:$true] %s45
      %51 = dma.hbm_to_vmem [thread:$0]  %s2, 25600, %s46, [#allocation7], 128, 128, 8
    $region13: #{tpu_custom_call.1} parent=1 // pred_fallthru
      _
    // Predicated region
    $region14: #{tpu_custom_call.1} parent=1 // pred_check
      _
    $region15: #{tpu_custom_call.1} parent=1 // pred_check_branch
      %53 = sbr.rel (0) target = $region17
    $region16: #{tpu_custom_call.1} parent=1 // pred_region
      %s55 = ssub.s32 25600, 25600
      %56 = vsyncadd [#allocation10], %s55
      %s57 = sshll.u32 [#allocation9], 4
      %s58 = int_to_ptr.vmem [resolvable:$true] %s57
      %63 = dma.hbm_to_vmem [thread:$0]  %s3, 25600, %s58, [#allocation10], 128, 128, 8
    $region17: #{tpu_custom_call.1} parent=1 // pred_fallthru
      _
    // Predicated region
    $region18: #{tpu_custom_call.1} parent=1 // pred_check
      _
    $region19: #{tpu_custom_call.1} parent=1 // pred_check_branch
      %65 = sbr.rel (0) target = $region21
    $region20: #{tpu_custom_call.1} parent=1 // pred_region
      %s67 = ssub.s32 25600, 25600
      %68 = vsyncadd [#allocation10], %s67
      %s69 = sshll.u32 [#allocation11], 4
      %s70 = int_to_ptr.vmem [resolvable:$true] %s69
      %75 = dma.hbm_to_vmem [thread:$0]  %s4, 25600, %s70, [#allocation10], 128, 128, 8
    $region21: #{tpu_custom_call.1} parent=1 // pred_fallthru
      _
    // Predicated region
    $region22: #{tpu_custom_call.1} parent=1 // pred_check
      _
    $region23: #{tpu_custom_call.1} parent=1 // pred_check_branch
      %77 = sbr.rel (0) target = $region25
    $region24: #{tpu_custom_call.1} parent=1 // pred_region
      _
    $region25: #{tpu_custom_call.1} parent=1 // pred_fallthru
      _
    // Predicated region
    $region26: #{tpu_custom_call.1} parent=1 // pred_check
      _
    $region27: #{tpu_custom_call.1} parent=1 // pred_check_branch
      %79 = sbr.rel (0) target = $region29
    $region28: #{tpu_custom_call.1} parent=1 // pred_region
      %80 = dma.done [#allocation4], 6400
    $region29: #{tpu_custom_call.1} parent=1 // pred_fallthru
      _
    // Predicated region
    $region30: #{tpu_custom_call.1} parent=1 // pred_check
      _
    $region31: #{tpu_custom_call.1} parent=1 // pred_check_branch
      %82 = sbr.rel (0) target = $region33
    $region32: #{tpu_custom_call.1} parent=1 // pred_region
      %83 = dma.done [#allocation7], 25600
    $region33: #{tpu_custom_call.1} parent=1 // pred_fallthru
      _
    // Predicated region
    $region34: #{tpu_custom_call.1} parent=1 // pred_check
      _
    $region35: #{tpu_custom_call.1} parent=1 // pred_check_branch
      %85 = sbr.rel (0) target = $region37
    $region36: #{tpu_custom_call.1} parent=1 // pred_region
      %86 = dma.done [#allocation7], 25600
    $region37: #{tpu_custom_call.1} parent=1 // pred_fallthru
      _
    // Predicated region
    $region38: #{tpu_custom_call.1} parent=1 // pred_check
      _
    $region39: #{tpu_custom_call.1} parent=1 // pred_check_branch
      %88 = sbr.rel (0) target = $region41
    $region40: #{tpu_custom_call.1} parent=1 // pred_region
      %89 = dma.done [#allocation10], 25600
    $region41: #{tpu_custom_call.1} parent=1 // pred_fallthru
      _
    // Predicated region
    $region42: #{tpu_custom_call.1} parent=1 // pred_check
      _
    $region43: #{tpu_custom_call.1} parent=1 // pred_check_branch
      %91 = sbr.rel (0) target = $region45
    $region44: #{tpu_custom_call.1} parent=1 // pred_region
      %92 = dma.done [#allocation10], 25600
    $region45: #{tpu_custom_call.1} parent=1 // pred_fallthru
      _
    %s93 = sld [smem:[#allocation2]]
    %v94 = vld [vmem:[#allocation3] sm:$0xff]
    %v95 = vld [vmem:[#allocation3 + $0x8] sm:$0xff]
    %v96 = vld [vmem:[#allocation3 + $0x10] sm:$0xff]
    %v97 = vld [vmem:[#allocation3 + $0x18] sm:$0xff]
    %v98 = vld [vmem:[#allocation3 + $0x20] sm:$0xff]
    %v99 = vld [vmem:[#allocation3 + $0x28] sm:$0xff]
    %v100 = vld [vmem:[#allocation3 + $0x30] sm:$0xff]
    %v101 = vld [vmem:[#allocation3 + $0x38] sm:$0xff]
    %v102 = vld [vmem:[#allocation3 + $0x40] sm:$0xff]
    %v103 = vld [vmem:[#allocation3 + $0x48] sm:$0xff]
    %v104 = vld [vmem:[#allocation3 + $0x50] sm:$0xff]
    %v105 = vld [vmem:[#allocation3 + $0x58] sm:$0xff]
    %v106 = vld [vmem:[#allocation3 + $0x60] sm:$0xff]
    %v107 = vld [vmem:[#allocation3 + $0x68] sm:$0xff]
    %v108 = vld [vmem:[#allocation3 + $0x70] sm:$0xff]
    %v109 = vld [vmem:[#allocation3 + $0x78] sm:$0xff]
    %v110 = vld [vmem:[#allocation3 + $0x80] sm:$0xff]
    %v111 = vld [vmem:[#allocation3 + $0x88] sm:$0xff]
    %v112 = vld [vmem:[#allocation3 + $0x90] sm:$0xff]
    %v113 = vld [vmem:[#allocation3 + $0x98] sm:$0xff]
    %v114 = vld [vmem:[#allocation3 + $0xa0] sm:$0xff]
    %v115 = vld [vmem:[#allocation3 + $0xa8] sm:$0xff]
    %v116 = vld [vmem:[#allocation3 + $0xb0] sm:$0xff]
    %v117 = vld [vmem:[#allocation3 + $0xb8] sm:$0xff]
    %v118 = vld [vmem:[#allocation3 + $0xc0] sm:$0xff]
    %v119 = vld [vmem:[#allocation3 + $0xc8] sm:$0xff]
    %v120 = vld [vmem:[#allocation3 + $0xd0] sm:$0xff]
    %v121 = vld [vmem:[#allocation3 + $0xd8] sm:$0xff]
    %v122 = vld [vmem:[#allocation3 + $0xe0] sm:$0xff]
    %v123 = vld [vmem:[#allocation3 + $0xe8] sm:$0xff]
    %v124 = vld [vmem:[#allocation3 + $0xf0] sm:$0xff]
    %v125 = vld [vmem:[#allocation3 + $0xf8] sm:$0xff]
    %v126 = vld [vmem:[#allocation3 + $0x100] sm:$0xff]
    %v127 = vld [vmem:[#allocation3 + $0x108] sm:$0xff]
    %v128 = vld [vmem:[#allocation3 + $0x110] sm:$0xff]
    %v129 = vld [vmem:[#allocation3 + $0x118] sm:$0xff]
    %v130 = vld [vmem:[#allocation3 + $0x120] sm:$0xff]
    %v131 = vld [vmem:[#allocation3 + $0x128] sm:$0xff]
    %v132 = vld [vmem:[#allocation3 + $0x130] sm:$0xff]
    %v133 = vld [vmem:[#allocation3 + $0x138] sm:$0xff]
    %v134 = vld [vmem:[#allocation3 + $0x140] sm:$0xff]
    %v135 = vld [vmem:[#allocation3 + $0x148] sm:$0xff]
    %v136 = vld [vmem:[#allocation3 + $0x150] sm:$0xff]
    %v137 = vld [vmem:[#allocation3 + $0x158] sm:$0xff]
    %v138 = vld [vmem:[#allocation3 + $0x160] sm:$0xff]
    %v139 = vld [vmem:[#allocation3 + $0x168] sm:$0xff]
    %v140 = vld [vmem:[#allocation3 + $0x170] sm:$0xff]
    %v141 = vld [vmem:[#allocation3 + $0x178] sm:$0xff]
    %v142 = vld [vmem:[#allocation3 + $0x180] sm:$0xff]
    %v143 = vld [vmem:[#allocation3 + $0x188] sm:$0xff]
    %v144 = vld [vmem:[#allocation6] sm:$0xff]
    %v145 = vld [vmem:[#allocation6 + $0x8] sm:$0xff]
    %v146 = vld [vmem:[#allocation6 + $0x10] sm:$0xff]
    %v147 = vld [vmem:[#allocation6 + $0x18] sm:$0xff]
    %v148 = vld [vmem:[#allocation6 + $0x20] sm:$0xff]
    %v149 = vld [vmem:[#allocation6 + $0x28] sm:$0xff]
    %v150 = vld [vmem:[#allocation6 + $0x30] sm:$0xff]
    %v151 = vld [vmem:[#allocation6 + $0x38] sm:$0xff]
    %v152 = vld [vmem:[#allocation6 + $0x40] sm:$0xff]
    %v153 = vld [vmem:[#allocation6 + $0x48] sm:$0xff]
    %v154 = vld [vmem:[#allocation6 + $0x50] sm:$0xff]
    %v155 = vld [vmem:[#allocation6 + $0x58] sm:$0xff]
    %v156 = vld [vmem:[#allocation6 + $0x60] sm:$0xff]
    %v157 = vld [vmem:[#allocation6 + $0x68] sm:$0xff]
    %v158 = vld [vmem:[#allocation6 + $0x70] sm:$0xff]
    %v159 = vld [vmem:[#allocation6 + $0x78] sm:$0xff]
    %v160 = vld [vmem:[#allocation6 + $0x80] sm:$0xff]
    %v161 = vld [vmem:[#allocation6 + $0x88] sm:$0xff]
    %v162 = vld [vmem:[#allocation6 + $0x90] sm:$0xff]
    %v163 = vld [vmem:[#allocation6 + $0x98] sm:$0xff]
    %v164 = vld [vmem:[#allocation6 + $0xa0] sm:$0xff]
    %v165 = vld [vmem:[#allocation6 + $0xa8] sm:$0xff]
    %v166 = vld [vmem:[#allocation6 + $0xb0] sm:$0xff]
    %v167 = vld [vmem:[#allocation6 + $0xb8] sm:$0xff]
    %v168 = vld [vmem:[#allocation6 + $0xc0] sm:$0xff]
    %v169 = vmul.f32 %v94, %v144
    %v170 = vmul.f32 %v95, %v145
    %v171 = vmul.f32 %v96, %v146
    %v172 = vmul.f32 %v97, %v147
    %v173 = vmul.f32 %v98, %v148
    %v174 = vmul.f32 %v99, %v149
    %v175 = vmul.f32 %v100, %v150
    %v176 = vmul.f32 %v101, %v151
    %v177 = vmul.f32 %v102, %v152
    %v178 = vmul.f32 %v103, %v153
    %v179 = vmul.f32 %v104, %v154
    %v180 = vmul.f32 %v105, %v155
    %v181 = vmul.f32 %v106, %v156
    %v182 = vmul.f32 %v107, %v157
    %v183 = vmul.f32 %v108, %v158
    %v184 = vmul.f32 %v109, %v159
    %v185 = vmul.f32 %v110, %v160
    %v186 = vmul.f32 %v111, %v161
    %v187 = vmul.f32 %v112, %v162
    %v188 = vmul.f32 %v113, %v163
    %v189 = vmul.f32 %v114, %v164
    %v190 = vmul.f32 %v115, %v165
    %v191 = vmul.f32 %v116, %v166
    %v192 = vmul.f32 %v117, %v167
    %v193 = vmul.f32 %v118, %v168
    %v194 = vld [vmem:[#allocation8] sm:$0xff]
    %v195 = vld [vmem:[#allocation8 + $0x8] sm:$0xff]
    %v196 = vld [vmem:[#allocation8 + $0x10] sm:$0xff]
    %v197 = vld [vmem:[#allocation8 + $0x18] sm:$0xff]
    %v198 = vld [vmem:[#allocation8 + $0x20] sm:$0xff]
    %v199 = vld [vmem:[#allocation8 + $0x28] sm:$0xff]
    %v200 = vld [vmem:[#allocation8 + $0x30] sm:$0xff]
    %v201 = vld [vmem:[#allocation8 + $0x38] sm:$0xff]
    %v202 = vld [vmem:[#allocation8 + $0x40] sm:$0xff]
    %v203 = vld [vmem:[#allocation8 + $0x48] sm:$0xff]
    %v204 = vld [vmem:[#allocation8 + $0x50] sm:$0xff]
    %v205 = vld [vmem:[#allocation8 + $0x58] sm:$0xff]
    %v206 = vld [vmem:[#allocation8 + $0x60] sm:$0xff]
    %v207 = vld [vmem:[#allocation8 + $0x68] sm:$0xff]
    %v208 = vld [vmem:[#allocation8 + $0x70] sm:$0xff]
    %v209 = vld [vmem:[#allocation8 + $0x78] sm:$0xff]
    %v210 = vld [vmem:[#allocation8 + $0x80] sm:$0xff]
    %v211 = vld [vmem:[#allocation8 + $0x88] sm:$0xff]
    %v212 = vld [vmem:[#allocation8 + $0x90] sm:$0xff]
    %v213 = vld [vmem:[#allocation8 + $0x98] sm:$0xff]
    %v214 = vld [vmem:[#allocation8 + $0xa0] sm:$0xff]
    %v215 = vld [vmem:[#allocation8 + $0xa8] sm:$0xff]
    %v216 = vld [vmem:[#allocation8 + $0xb0] sm:$0xff]
    %v217 = vld [vmem:[#allocation8 + $0xb8] sm:$0xff]
    %v218 = vld [vmem:[#allocation8 + $0xc0] sm:$0xff]
    %v219 = vmul.f32 %v119, %v194
    %v220 = vmul.f32 %v120, %v195
    %v221 = vmul.f32 %v121, %v196
    %v222 = vmul.f32 %v122, %v197
    %v223 = vmul.f32 %v123, %v198
    %v224 = vmul.f32 %v124, %v199
    %v225 = vmul.f32 %v125, %v200
    %v226 = vmul.f32 %v126, %v201
    %v227 = vmul.f32 %v127, %v202
    %v228 = vmul.f32 %v128, %v203
    %v229 = vmul.f32 %v129, %v204
    %v230 = vmul.f32 %v130, %v205
    %v231 = vmul.f32 %v131, %v206
    %v232 = vmul.f32 %v132, %v207
    %v233 = vmul.f32 %v133, %v208
    %v234 = vmul.f32 %v134, %v209
    %v235 = vmul.f32 %v135, %v210
    %v236 = vmul.f32 %v136, %v211
    %v237 = vmul.f32 %v137, %v212
    %v238 = vmul.f32 %v138, %v213
    %v239 = vmul.f32 %v139, %v214
    %v240 = vmul.f32 %v140, %v215
    %v241 = vmul.f32 %v141, %v216
    %v242 = vmul.f32 %v142, %v217
    %v243 = vmul.f32 %v143, %v218
    %v244 = vadd.f32 %v169, %v219
    %v245 = vadd.f32 %v170, %v220
    %v246 = vadd.f32 %v171, %v221
    %v247 = vadd.f32 %v172, %v222
    %v248 = vadd.f32 %v173, %v223
    %v249 = vadd.f32 %v174, %v224
    %v250 = vadd.f32 %v175, %v225
    %v251 = vadd.f32 %v176, %v226
    %v252 = vadd.f32 %v177, %v227
    %v253 = vadd.f32 %v178, %v228
    %v254 = vadd.f32 %v179, %v229
    %v255 = vadd.f32 %v180, %v230
    %v256 = vadd.f32 %v181, %v231
    %v257 = vadd.f32 %v182, %v232
    %v258 = vadd.f32 %v183, %v233
    %v259 = vadd.f32 %v184, %v234
    %v260 = vadd.f32 %v185, %v235
    %v261 = vadd.f32 %v186, %v236
    %v262 = vadd.f32 %v187, %v237
    %v263 = vadd.f32 %v188, %v238
    %v264 = vadd.f32 %v189, %v239
    %v265 = vadd.f32 %v190, %v240
    %v266 = vadd.f32 %v191, %v241
    %v267 = vadd.f32 %v192, %v242
    %v268 = vadd.f32 %v193, %v243
    %v269 = vld [vmem:[#allocation9] sm:$0xff]
    %v270 = vld [vmem:[#allocation9 + $0x8] sm:$0xff]
    %v271 = vld [vmem:[#allocation9 + $0x10] sm:$0xff]
    %v272 = vld [vmem:[#allocation9 + $0x18] sm:$0xff]
    %v273 = vld [vmem:[#allocation9 + $0x20] sm:$0xff]
    %v274 = vld [vmem:[#allocation9 + $0x28] sm:$0xff]
    %v275 = vld [vmem:[#allocation9 + $0x30] sm:$0xff]
    %v276 = vld [vmem:[#allocation9 + $0x38] sm:$0xff]
    %v277 = vld [vmem:[#allocation9 + $0x40] sm:$0xff]
    %v278 = vld [vmem:[#allocation9 + $0x48] sm:$0xff]
    %v279 = vld [vmem:[#allocation9 + $0x50] sm:$0xff]
    %v280 = vld [vmem:[#allocation9 + $0x58] sm:$0xff]
    %v281 = vld [vmem:[#allocation9 + $0x60] sm:$0xff]
    %v282 = vld [vmem:[#allocation9 + $0x68] sm:$0xff]
    %v283 = vld [vmem:[#allocation9 + $0x70] sm:$0xff]
    %v284 = vld [vmem:[#allocation9 + $0x78] sm:$0xff]
    %v285 = vld [vmem:[#allocation9 + $0x80] sm:$0xff]
    %v286 = vld [vmem:[#allocation9 + $0x88] sm:$0xff]
    %v287 = vld [vmem:[#allocation9 + $0x90] sm:$0xff]
    %v288 = vld [vmem:[#allocation9 + $0x98] sm:$0xff]
    %v289 = vld [vmem:[#allocation9 + $0xa0] sm:$0xff]
    %v290 = vld [vmem:[#allocation9 + $0xa8] sm:$0xff]
    %v291 = vld [vmem:[#allocation9 + $0xb0] sm:$0xff]
    %v292 = vld [vmem:[#allocation9 + $0xb8] sm:$0xff]
    %v293 = vld [vmem:[#allocation9 + $0xc0] sm:$0xff]
    %v294 = vadd.f32 %v244, %v269
    %v295 = vadd.f32 %v245, %v270
    %v296 = vadd.f32 %v246, %v271
    %v297 = vadd.f32 %v247, %v272
    %v298 = vadd.f32 %v248, %v273
    %v299 = vadd.f32 %v249, %v274
    %v300 = vadd.f32 %v250, %v275
    %v301 = vadd.f32 %v251, %v276
    %v302 = vadd.f32 %v252, %v277
    %v303 = vadd.f32 %v253, %v278
    %v304 = vadd.f32 %v254, %v279
    %v305 = vadd.f32 %v255, %v280
    %v306 = vadd.f32 %v256, %v281
    %v307 = vadd.f32 %v257, %v282
    %v308 = vadd.f32 %v258, %v283
    %v309 = vadd.f32 %v259, %v284
    %v310 = vadd.f32 %v260, %v285
    %v311 = vadd.f32 %v261, %v286
    %v312 = vadd.f32 %v262, %v287
    %v313 = vadd.f32 %v263, %v288
    %v314 = vadd.f32 %v264, %v289
    %v315 = vadd.f32 %v265, %v290
    %v316 = vadd.f32 %v266, %v291
    %v317 = vadd.f32 %v267, %v292
    %v318 = vadd.f32 %v268, %v293
    %v319 = vmax.f32 %v294, 0.0
    %v320 = vmax.f32 %v295, 0.0
    %v321 = vmax.f32 %v296, 0.0
    %v322 = vmax.f32 %v297, 0.0
    %v323 = vmax.f32 %v298, 0.0
    %v324 = vmax.f32 %v299, 0.0
    %v325 = vmax.f32 %v300, 0.0
    %v326 = vmax.f32 %v301, 0.0
    %v327 = vmax.f32 %v302, 0.0
    %v328 = vmax.f32 %v303, 0.0
    %v329 = vmax.f32 %v304, 0.0
    %v330 = vmax.f32 %v305, 0.0
    %v331 = vmax.f32 %v306, 0.0
    %v332 = vmax.f32 %v307, 0.0
    %v333 = vmax.f32 %v308, 0.0
    %v334 = vmax.f32 %v309, 0.0
    %v335 = vmax.f32 %v310, 0.0
    %v336 = vmax.f32 %v311, 0.0
    %v337 = vmax.f32 %v312, 0.0
    %v338 = vmax.f32 %v313, 0.0
    %v339 = vmax.f32 %v314, 0.0
    %v340 = vmax.f32 %v315, 0.0
    %v341 = vmax.f32 %v316, 0.0
    %v342 = vmax.f32 %v317, 0.0
    %v343 = vmax.f32 %v318, 0.0
    %v344 = vld [vmem:[#allocation11] sm:$0xff]
    %v345 = vld [vmem:[#allocation11 + $0x8] sm:$0xff]
    %v346 = vld [vmem:[#allocation11 + $0x10] sm:$0xff]
    %v347 = vld [vmem:[#allocation11 + $0x18] sm:$0xff]
    %v348 = vld [vmem:[#allocation11 + $0x20] sm:$0xff]
    %v349 = vld [vmem:[#allocation11 + $0x28] sm:$0xff]
    %v350 = vld [vmem:[#allocation11 + $0x30] sm:$0xff]
    %v351 = vld [vmem:[#allocation11 + $0x38] sm:$0xff]
    %v352 = vld [vmem:[#allocation11 + $0x40] sm:$0xff]
    %v353 = vld [vmem:[#allocation11 + $0x48] sm:$0xff]
    %v354 = vld [vmem:[#allocation11 + $0x50] sm:$0xff]
    %v355 = vld [vmem:[#allocation11 + $0x58] sm:$0xff]
    %v356 = vld [vmem:[#allocation11 + $0x60] sm:$0xff]
    %v357 = vld [vmem:[#allocation11 + $0x68] sm:$0xff]
    %v358 = vld [vmem:[#allocation11 + $0x70] sm:$0xff]
    %v359 = vld [vmem:[#allocation11 + $0x78] sm:$0xff]
    %v360 = vld [vmem:[#allocation11 + $0x80] sm:$0xff]
    %v361 = vld [vmem:[#allocation11 + $0x88] sm:$0xff]
    %v362 = vld [vmem:[#allocation11 + $0x90] sm:$0xff]
    %v363 = vld [vmem:[#allocation11 + $0x98] sm:$0xff]
    %v364 = vld [vmem:[#allocation11 + $0xa0] sm:$0xff]
    %v365 = vld [vmem:[#allocation11 + $0xa8] sm:$0xff]
    %v366 = vld [vmem:[#allocation11 + $0xb0] sm:$0xff]
    %v367 = vld [vmem:[#allocation11 + $0xb8] sm:$0xff]
    %v368 = vld [vmem:[#allocation11 + $0xc0] sm:$0xff]
    %v369 = vmul.f32 %v319, %v344
    %v370 = vmul.f32 %v320, %v345
    %v371 = vmul.f32 %v321, %v346
    %v372 = vmul.f32 %v322, %v347
    %v373 = vmul.f32 %v323, %v348
    %v374 = vmul.f32 %v324, %v349
    %v375 = vmul.f32 %v325, %v350
    %v376 = vmul.f32 %v326, %v351
    %v377 = vmul.f32 %v327, %v352
    %v378 = vmul.f32 %v328, %v353
    %v379 = vmul.f32 %v329, %v354
    %v380 = vmul.f32 %v330, %v355
    %v381 = vmul.f32 %v331, %v356
    %v382 = vmul.f32 %v332, %v357
    %v383 = vmul.f32 %v333, %v358
    %v384 = vmul.f32 %v334, %v359
    %v385 = vmul.f32 %v335, %v360
    %v386 = vmul.f32 %v336, %v361
    %v387 = vmul.f32 %v337, %v362
    %v388 = vmul.f32 %v338, %v363
    %v389 = vmul.f32 %v339, %v364
    %v390 = vmul.f32 %v340, %v365
    %v391 = vmul.f32 %v341, %v366
    %v392 = vmul.f32 %v342, %v367
    %v393 = vmul.f32 %v343, %v368
    %v394 = vadd.f32 %v369, %v370
    %v395 = vadd.f32 %v394, %v371
    %v396 = vadd.f32 %v395, %v372
    %v397 = vadd.f32 %v396, %v373
    %v398 = vadd.f32 %v397, %v374
    %v399 = vadd.f32 %v398, %v375
    %v400 = vadd.f32 %v399, %v376
    %v401 = vadd.f32 %v400, %v377
    %v402 = vadd.f32 %v401, %v378
    %v403 = vadd.f32 %v402, %v379
    %v404 = vadd.f32 %v403, %v380
    %v405 = vadd.f32 %v404, %v381
    %v406 = vadd.f32 %v405, %v382
    %v407 = vadd.f32 %v406, %v383
    %v408 = vadd.f32 %v407, %v384
    %v409 = vadd.f32 %v408, %v385
    %v410 = vadd.f32 %v409, %v386
    %v411 = vadd.f32 %v410, %v387
    %v412 = vadd.f32 %v411, %v388
    %v413 = vadd.f32 %v412, %v389
    %v414 = vadd.f32 %v413, %v390
    %v415 = vadd.f32 %v414, %v391
    %v416 = vadd.f32 %v415, %v392
    %v417 = vadd.f32 %v416, %v393
    %v418 = vrot.slane %v417, 4
    %v419 = vadd.f32 %v417, %v418
    %v420 = vrot.slane %v419, 2
    %v421 = vadd.f32 %v419, %v420
    %v422 = vrot.slane %v421, 1
    %v423 = vadd.f32 %v421, %v422
    %s424 = scalar_lea.vmem [#allocation6], 200
    %v425 = vld [vmem:[%s424] sm:$0xff]
    %v426 = vld [vmem:[%s424 + $0x8] sm:$0xff]
    %v427 = vld [vmem:[%s424 + $0x10] sm:$0xff]
    %v428 = vld [vmem:[%s424 + $0x18] sm:$0xff]
    %v429 = vld [vmem:[%s424 + $0x20] sm:$0xff]
    %v430 = vld [vmem:[%s424 + $0x28] sm:$0xff]
    %v431 = vld [vmem:[%s424 + $0x30] sm:$0xff]
    %v432 = vld [vmem:[%s424 + $0x38] sm:$0xff]
    %v433 = vld [vmem:[%s424 + $0x40] sm:$0xff]
    %v434 = vld [vmem:[%s424 + $0x48] sm:$0xff]
    %v435 = vld [vmem:[%s424 + $0x50] sm:$0xff]
    %v436 = vld [vmem:[%s424 + $0x58] sm:$0xff]
    %v437 = vld [vmem:[%s424 + $0x60] sm:$0xff]
    %v438 = vld [vmem:[%s424 + $0x68] sm:$0xff]
    %v439 = vld [vmem:[%s424 + $0x70] sm:$0xff]
    %v440 = vld [vmem:[%s424 + $0x78] sm:$0xff]
    %v441 = vld [vmem:[%s424 + $0x80] sm:$0xff]
    %v442 = vld [vmem:[%s424 + $0x88] sm:$0xff]
    %v443 = vld [vmem:[%s424 + $0x90] sm:$0xff]
    %v444 = vld [vmem:[%s424 + $0x98] sm:$0xff]
    %v445 = vld [vmem:[%s424 + $0xa0] sm:$0xff]
    %v446 = vld [vmem:[%s424 + $0xa8] sm:$0xff]
    %v447 = vld [vmem:[%s424 + $0xb0] sm:$0xff]
    %v448 = vld [vmem:[%s424 + $0xb8] sm:$0xff]
    %v449 = vld [vmem:[%s424 + $0xc0] sm:$0xff]
    %v450 = vmul.f32 %v94, %v425
    %v451 = vmul.f32 %v95, %v426
    %v452 = vmul.f32 %v96, %v427
    %v453 = vmul.f32 %v97, %v428
    %v454 = vmul.f32 %v98, %v429
    %v455 = vmul.f32 %v99, %v430
    %v456 = vmul.f32 %v100, %v431
    %v457 = vmul.f32 %v101, %v432
    %v458 = vmul.f32 %v102, %v433
    %v459 = vmul.f32 %v103, %v434
    %v460 = vmul.f32 %v104, %v435
    %v461 = vmul.f32 %v105, %v436
    %v462 = vmul.f32 %v106, %v437
    %v463 = vmul.f32 %v107, %v438
    %v464 = vmul.f32 %v108, %v439
    %v465 = vmul.f32 %v109, %v440
    %v466 = vmul.f32 %v110, %v441
    %v467 = vmul.f32 %v111, %v442
    %v468 = vmul.f32 %v112, %v443
    %v469 = vmul.f32 %v113, %v444
    %v470 = vmul.f32 %v114, %v445
    %v471 = vmul.f32 %v115, %v446
    %v472 = vmul.f32 %v116, %v447
    %v473 = vmul.f32 %v117, %v448
    %v474 = vmul.f32 %v118, %v449
    %s475 = scalar_lea.vmem [#allocation8], 200
    %v476 = vld [vmem:[%s475] sm:$0xff]
    %v477 = vld [vmem:[%s475 + $0x8] sm:$0xff]
    %v478 = vld [vmem:[%s475 + $0x10] sm:$0xff]
    %v479 = vld [vmem:[%s475 + $0x18] sm:$0xff]
    %v480 = vld [vmem:[%s475 + $0x20] sm:$0xff]
    %v481 = vld [vmem:[%s475 + $0x28] sm:$0xff]
    %v482 = vld [vmem:[%s475 + $0x30] sm:$0xff]
    %v483 = vld [vmem:[%s475 + $0x38] sm:$0xff]
    %v484 = vld [vmem:[%s475 + $0x40] sm:$0xff]
    %v485 = vld [vmem:[%s475 + $0x48] sm:$0xff]
    %v486 = vld [vmem:[%s475 + $0x50] sm:$0xff]
    %v487 = vld [vmem:[%s475 + $0x58] sm:$0xff]
    %v488 = vld [vmem:[%s475 + $0x60] sm:$0xff]
    %v489 = vld [vmem:[%s475 + $0x68] sm:$0xff]
    %v490 = vld [vmem:[%s475 + $0x70] sm:$0xff]
    %v491 = vld [vmem:[%s475 + $0x78] sm:$0xff]
    %v492 = vld [vmem:[%s475 + $0x80] sm:$0xff]
    %v493 = vld [vmem:[%s475 + $0x88] sm:$0xff]
    %v494 = vld [vmem:[%s475 + $0x90] sm:$0xff]
    %v495 = vld [vmem:[%s475 + $0x98] sm:$0xff]
    %v496 = vld [vmem:[%s475 + $0xa0] sm:$0xff]
    %v497 = vld [vmem:[%s475 + $0xa8] sm:$0xff]
    %v498 = vld [vmem:[%s475 + $0xb0] sm:$0xff]
    %v499 = vld [vmem:[%s475 + $0xb8] sm:$0xff]
    %v500 = vld [vmem:[%s475 + $0xc0] sm:$0xff]
    %v501 = vmul.f32 %v119, %v476
    %v502 = vmul.f32 %v120, %v477
    %v503 = vmul.f32 %v121, %v478
    %v504 = vmul.f32 %v122, %v479
    %v505 = vmul.f32 %v123, %v480
    %v506 = vmul.f32 %v124, %v481
    %v507 = vmul.f32 %v125, %v482
    %v508 = vmul.f32 %v126, %v483
    %v509 = vmul.f32 %v127, %v484
    %v510 = vmul.f32 %v128, %v485
    %v511 = vmul.f32 %v129, %v486
    %v512 = vmul.f32 %v130, %v487
    %v513 = vmul.f32 %v131, %v488
    %v514 = vmul.f32 %v132, %v489
    %v515 = vmul.f32 %v133, %v490
    %v516 = vmul.f32 %v134, %v491
    %v517 = vmul.f32 %v135, %v492
    %v518 = vmul.f32 %v136, %v493
    %v519 = vmul.f32 %v137, %v494
    %v520 = vmul.f32 %v138, %v495
    %v521 = vmul.f32 %v139, %v496
    %v522 = vmul.f32 %v140, %v497
    %v523 = vmul.f32 %v141, %v498
    %v524 = vmul.f32 %v142, %v499
    %v525 = vmul.f32 %v143, %v500
    %v526 = vadd.f32 %v450, %v501
    %v527 = vadd.f32 %v451, %v502
    %v528 = vadd.f32 %v452, %v503
    %v529 = vadd.f32 %v453, %v504
    %v530 = vadd.f32 %v454, %v505
    %v531 = vadd.f32 %v455, %v506
    %v532 = vadd.f32 %v456, %v507
    %v533 = vadd.f32 %v457, %v508
    %v534 = vadd.f32 %v458, %v509
    %v535 = vadd.f32 %v459, %v510
    %v536 = vadd.f32 %v460, %v511
    %v537 = vadd.f32 %v461, %v512
    %v538 = vadd.f32 %v462, %v513
    %v539 = vadd.f32 %v463, %v514
    %v540 = vadd.f32 %v464, %v515
    %v541 = vadd.f32 %v465, %v516
    %v542 = vadd.f32 %v466, %v517
    %v543 = vadd.f32 %v467, %v518
    %v544 = vadd.f32 %v468, %v519
    %v545 = vadd.f32 %v469, %v520
    %v546 = vadd.f32 %v470, %v521
    %v547 = vadd.f32 %v471, %v522
    %v548 = vadd.f32 %v472, %v523
    %v549 = vadd.f32 %v473, %v524
    %v550 = vadd.f32 %v474, %v525
    %s551 = scalar_lea.vmem [#allocation9], 200
    %v552 = vld [vmem:[%s551] sm:$0xff]
    %v553 = vld [vmem:[%s551 + $0x8] sm:$0xff]
    %v554 = vld [vmem:[%s551 + $0x10] sm:$0xff]
    %v555 = vld [vmem:[%s551 + $0x18] sm:$0xff]
    %v556 = vld [vmem:[%s551 + $0x20] sm:$0xff]
    %v557 = vld [vmem:[%s551 + $0x28] sm:$0xff]
    %v558 = vld [vmem:[%s551 + $0x30] sm:$0xff]
    %v559 = vld [vmem:[%s551 + $0x38] sm:$0xff]
    %v560 = vld [vmem:[%s551 + $0x40] sm:$0xff]
    %v561 = vld [vmem:[%s551 + $0x48] sm:$0xff]
    %v562 = vld [vmem:[%s551 + $0x50] sm:$0xff]
    %v563 = vld [vmem:[%s551 + $0x58] sm:$0xff]
    %v564 = vld [vmem:[%s551 + $0x60] sm:$0xff]
    %v565 = vld [vmem:[%s551 + $0x68] sm:$0xff]
    %v566 = vld [vmem:[%s551 + $0x70] sm:$0xff]
    %v567 = vld [vmem:[%s551 + $0x78] sm:$0xff]
    %v568 = vld [vmem:[%s551 + $0x80] sm:$0xff]
    %v569 = vld [vmem:[%s551 + $0x88] sm:$0xff]
    %v570 = vld [vmem:[%s551 + $0x90] sm:$0xff]
    %v571 = vld [vmem:[%s551 + $0x98] sm:$0xff]
    %v572 = vld [vmem:[%s551 + $0xa0] sm:$0xff]
    %v573 = vld [vmem:[%s551 + $0xa8] sm:$0xff]
    %v574 = vld [vmem:[%s551 + $0xb0] sm:$0xff]
    %v575 = vld [vmem:[%s551 + $0xb8] sm:$0xff]
    %v576 = vld [vmem:[%s551 + $0xc0] sm:$0xff]
    %v577 = vadd.f32 %v526, %v552
    %v578 = vadd.f32 %v527, %v553
    %v579 = vadd.f32 %v528, %v554
    %v580 = vadd.f32 %v529, %v555
    %v581 = vadd.f32 %v530, %v556
    %v582 = vadd.f32 %v531, %v557
    %v583 = vadd.f32 %v532, %v558
    %v584 = vadd.f32 %v533, %v559
    %v585 = vadd.f32 %v534, %v560
    %v586 = vadd.f32 %v535, %v561
    %v587 = vadd.f32 %v536, %v562
    %v588 = vadd.f32 %v537, %v563
    %v589 = vadd.f32 %v538, %v564
    %v590 = vadd.f32 %v539, %v565
    %v591 = vadd.f32 %v540, %v566
    %v592 = vadd.f32 %v541, %v567
    %v593 = vadd.f32 %v542, %v568
    %v594 = vadd.f32 %v543, %v569
    %v595 = vadd.f32 %v544, %v570
    %v596 = vadd.f32 %v545, %v571
    %v597 = vadd.f32 %v546, %v572
    %v598 = vadd.f32 %v547, %v573
    %v599 = vadd.f32 %v548, %v574
    %v600 = vadd.f32 %v549, %v575
    %v601 = vadd.f32 %v550, %v576
    %v602 = vmax.f32 %v577, 0.0
    %v603 = vmax.f32 %v578, 0.0
    %v604 = vmax.f32 %v579, 0.0
    %v605 = vmax.f32 %v580, 0.0
    %v606 = vmax.f32 %v581, 0.0
    %v607 = vmax.f32 %v582, 0.0
    %v608 = vmax.f32 %v583, 0.0
    %v609 = vmax.f32 %v584, 0.0
    %v610 = vmax.f32 %v585, 0.0
    %v611 = vmax.f32 %v586, 0.0
    %v612 = vmax.f32 %v587, 0.0
    %v613 = vmax.f32 %v588, 0.0
    %v614 = vmax.f32 %v589, 0.0
    %v615 = vmax.f32 %v590, 0.0
    %v616 = vmax.f32 %v591, 0.0
    %v617 = vmax.f32 %v592, 0.0
    %v618 = vmax.f32 %v593, 0.0
    %v619 = vmax.f32 %v594, 0.0
    %v620 = vmax.f32 %v595, 0.0
    %v621 = vmax.f32 %v596, 0.0
    %v622 = vmax.f32 %v597, 0.0
    %v623 = vmax.f32 %v598, 0.0
    %v624 = vmax.f32 %v599, 0.0
    %v625 = vmax.f32 %v600, 0.0
    %v626 = vmax.f32 %v601, 0.0
    %s627 = scalar_lea.vmem [#allocation11], 200
    %v628 = vld [vmem:[%s627] sm:$0xff]
    %v629 = vld [vmem:[%s627 + $0x8] sm:$0xff]
    %v630 = vld [vmem:[%s627 + $0x10] sm:$0xff]
    %v631 = vld [vmem:[%s627 + $0x18] sm:$0xff]
    %v632 = vld [vmem:[%s627 + $0x20] sm:$0xff]
    %v633 = vld [vmem:[%s627 + $0x28] sm:$0xff]
    %v634 = vld [vmem:[%s627 + $0x30] sm:$0xff]
    %v635 = vld [vmem:[%s627 + $0x38] sm:$0xff]
    %v636 = vld [vmem:[%s627 + $0x40] sm:$0xff]
    %v637 = vld [vmem:[%s627 + $0x48] sm:$0xff]
    %v638 = vld [vmem:[%s627 + $0x50] sm:$0xff]
    %v639 = vld [vmem:[%s627 + $0x58] sm:$0xff]
    %v640 = vld [vmem:[%s627 + $0x60] sm:$0xff]
    %v641 = vld [vmem:[%s627 + $0x68] sm:$0xff]
    %v642 = vld [vmem:[%s627 + $0x70] sm:$0xff]
    %v643 = vld [vmem:[%s627 + $0x78] sm:$0xff]
    %v644 = vld [vmem:[%s627 + $0x80] sm:$0xff]
    %v645 = vld [vmem:[%s627 + $0x88] sm:$0xff]
    %v646 = vld [vmem:[%s627 + $0x90] sm:$0xff]
    %v647 = vld [vmem:[%s627 + $0x98] sm:$0xff]
    %v648 = vld [vmem:[%s627 + $0xa0] sm:$0xff]
    %v649 = vld [vmem:[%s627 + $0xa8] sm:$0xff]
    %v650 = vld [vmem:[%s627 + $0xb0] sm:$0xff]
    %v651 = vld [vmem:[%s627 + $0xb8] sm:$0xff]
    %v652 = vld [vmem:[%s627 + $0xc0] sm:$0xff]
    %v653 = vmul.f32 %v602, %v628
    %v654 = vmul.f32 %v603, %v629
    %v655 = vmul.f32 %v604, %v630
    %v656 = vmul.f32 %v605, %v631
    %v657 = vmul.f32 %v606, %v632
    %v658 = vmul.f32 %v607, %v633
    %v659 = vmul.f32 %v608, %v634
    %v660 = vmul.f32 %v609, %v635
    %v661 = vmul.f32 %v610, %v636
    %v662 = vmul.f32 %v611, %v637
    %v663 = vmul.f32 %v612, %v638
    %v664 = vmul.f32 %v613, %v639
    %v665 = vmul.f32 %v614, %v640
    %v666 = vmul.f32 %v615, %v641
    %v667 = vmul.f32 %v616, %v642
    %v668 = vmul.f32 %v617, %v643
    %v669 = vmul.f32 %v618, %v644
    %v670 = vmul.f32 %v619, %v645
    %v671 = vmul.f32 %v620, %v646
    %v672 = vmul.f32 %v621, %v647
    %v673 = vmul.f32 %v622, %v648
    %v674 = vmul.f32 %v623, %v649
    %v675 = vmul.f32 %v624, %v650
    %v676 = vmul.f32 %v625, %v651
    %v677 = vmul.f32 %v626, %v652
    %v678 = vadd.f32 %v653, %v654
    %v679 = vadd.f32 %v678, %v655
    %v680 = vadd.f32 %v679, %v656
    %v681 = vadd.f32 %v680, %v657
    %v682 = vadd.f32 %v681, %v658
    %v683 = vadd.f32 %v682, %v659
    %v684 = vadd.f32 %v683, %v660
    %v685 = vadd.f32 %v684, %v661
    %v686 = vadd.f32 %v685, %v662
    %v687 = vadd.f32 %v686, %v663
    %v688 = vadd.f32 %v687, %v664
    %v689 = vadd.f32 %v688, %v665
    %v690 = vadd.f32 %v689, %v666
    %v691 = vadd.f32 %v690, %v667
    %v692 = vadd.f32 %v691, %v668
    %v693 = vadd.f32 %v692, %v669
    %v694 = vadd.f32 %v693, %v670
    %v695 = vadd.f32 %v694, %v671
    %v696 = vadd.f32 %v695, %v672
    %v697 = vadd.f32 %v696, %v673
    %v698 = vadd.f32 %v697, %v674
    %v699 = vadd.f32 %v698, %v675
    %v700 = vadd.f32 %v699, %v676
    %v701 = vadd.f32 %v700, %v677
    %v702 = vrot.slane %v701, 4
    %v703 = vadd.f32 %v701, %v702
    %v704 = vrot.slane %v703, 2
    %v705 = vadd.f32 %v703, %v704
    %v706 = vrot.slane %v705, 1
    %v707 = vadd.f32 %v705, %v706
    %v708 = vadd.f32 %v423, %v707
    %s709 = scalar_lea.vmem [#allocation6], 400
    %v710 = vld [vmem:[%s709] sm:$0xff]
    %v711 = vld [vmem:[%s709 + $0x8] sm:$0xff]
    %v712 = vld [vmem:[%s709 + $0x10] sm:$0xff]
    %v713 = vld [vmem:[%s709 + $0x18] sm:$0xff]
    %v714 = vld [vmem:[%s709 + $0x20] sm:$0xff]
    %v715 = vld [vmem:[%s709 + $0x28] sm:$0xff]
    %v716 = vld [vmem:[%s709 + $0x30] sm:$0xff]
    %v717 = vld [vmem:[%s709 + $0x38] sm:$0xff]
    %v718 = vld [vmem:[%s709 + $0x40] sm:$0xff]
    %v719 = vld [vmem:[%s709 + $0x48] sm:$0xff]
    %v720 = vld [vmem:[%s709 + $0x50] sm:$0xff]
    %v721 = vld [vmem:[%s709 + $0x58] sm:$0xff]
    %v722 = vld [vmem:[%s709 + $0x60] sm:$0xff]
    %v723 = vld [vmem:[%s709 + $0x68] sm:$0xff]
    %v724 = vld [vmem:[%s709 + $0x70] sm:$0xff]
    %v725 = vld [vmem:[%s709 + $0x78] sm:$0xff]
    %v726 = vld [vmem:[%s709 + $0x80] sm:$0xff]
    %v727 = vld [vmem:[%s709 + $0x88] sm:$0xff]
    %v728 = vld [vmem:[%s709 + $0x90] sm:$0xff]
    %v729 = vld [vmem:[%s709 + $0x98] sm:$0xff]
    %v730 = vld [vmem:[%s709 + $0xa0] sm:$0xff]
    %v731 = vld [vmem:[%s709 + $0xa8] sm:$0xff]
    %v732 = vld [vmem:[%s709 + $0xb0] sm:$0xff]
    %v733 = vld [vmem:[%s709 + $0xb8] sm:$0xff]
    %v734 = vld [vmem:[%s709 + $0xc0] sm:$0xff]
    %v735 = vmul.f32 %v94, %v710
    %v736 = vmul.f32 %v95, %v711
    %v737 = vmul.f32 %v96, %v712
    %v738 = vmul.f32 %v97, %v713
    %v739 = vmul.f32 %v98, %v714
    %v740 = vmul.f32 %v99, %v715
    %v741 = vmul.f32 %v100, %v716
    %v742 = vmul.f32 %v101, %v717
    %v743 = vmul.f32 %v102, %v718
    %v744 = vmul.f32 %v103, %v719
    %v745 = vmul.f32 %v104, %v720
    %v746 = vmul.f32 %v105, %v721
    %v747 = vmul.f32 %v106, %v722
    %v748 = vmul.f32 %v107, %v723
    %v749 = vmul.f32 %v108, %v724
    %v750 = vmul.f32 %v109, %v725
    %v751 = vmul.f32 %v110, %v726
    %v752 = vmul.f32 %v111, %v727
    %v753 = vmul.f32 %v112, %v728
    %v754 = vmul.f32 %v113, %v729
    %v755 = vmul.f32 %v114, %v730
    %v756 = vmul.f32 %v115, %v731
    %v757 = vmul.f32 %v116, %v732
    %v758 = vmul.f32 %v117, %v733
    %v759 = vmul.f32 %v118, %v734
    %s760 = scalar_lea.vmem [#allocation8], 400
    %v761 = vld [vmem:[%s760] sm:$0xff]
    %v762 = vld [vmem:[%s760 + $0x8] sm:$0xff]
    %v763 = vld [vmem:[%s760 + $0x10] sm:$0xff]
    %v764 = vld [vmem:[%s760 + $0x18] sm:$0xff]
    %v765 = vld [vmem:[%s760 + $0x20] sm:$0xff]
    %v766 = vld [vmem:[%s760 + $0x28] sm:$0xff]
    %v767 = vld [vmem:[%s760 + $0x30] sm:$0xff]
    %v768 = vld [vmem:[%s760 + $0x38] sm:$0xff]
    %v769 = vld [vmem:[%s760 + $0x40] sm:$0xff]
    %v770 = vld [vmem:[%s760 + $0x48] sm:$0xff]
    %v771 = vld [vmem:[%s760 + $0x50] sm:$0xff]
    %v772 = vld [vmem:[%s760 + $0x58] sm:$0xff]
    %v773 = vld [vmem:[%s760 + $0x60] sm:$0xff]
    %v774 = vld [vmem:[%s760 + $0x68] sm:$0xff]
    %v775 = vld [vmem:[%s760 + $0x70] sm:$0xff]
    %v776 = vld [vmem:[%s760 + $0x78] sm:$0xff]
    %v777 = vld [vmem:[%s760 + $0x80] sm:$0xff]
    %v778 = vld [vmem:[%s760 + $0x88] sm:$0xff]
    %v779 = vld [vmem:[%s760 + $0x90] sm:$0xff]
    %v780 = vld [vmem:[%s760 + $0x98] sm:$0xff]
    %v781 = vld [vmem:[%s760 + $0xa0] sm:$0xff]
    %v782 = vld [vmem:[%s760 + $0xa8] sm:$0xff]
    %v783 = vld [vmem:[%s760 + $0xb0] sm:$0xff]
    %v784 = vld [vmem:[%s760 + $0xb8] sm:$0xff]
    %v785 = vld [vmem:[%s760 + $0xc0] sm:$0xff]
    %v786 = vmul.f32 %v119, %v761
    %v787 = vmul.f32 %v120, %v762
    %v788 = vmul.f32 %v121, %v763
    %v789 = vmul.f32 %v122, %v764
    %v790 = vmul.f32 %v123, %v765
    %v791 = vmul.f32 %v124, %v766
    %v792 = vmul.f32 %v125, %v767
    %v793 = vmul.f32 %v126, %v768
    %v794 = vmul.f32 %v127, %v769
    %v795 = vmul.f32 %v128, %v770
    %v796 = vmul.f32 %v129, %v771
    %v797 = vmul.f32 %v130, %v772
    %v798 = vmul.f32 %v131, %v773
    %v799 = vmul.f32 %v132, %v774
    %v800 = vmul.f32 %v133, %v775
    %v801 = vmul.f32 %v134, %v776
    %v802 = vmul.f32 %v135, %v777
    %v803 = vmul.f32 %v136, %v778
    %v804 = vmul.f32 %v137, %v779
    %v805 = vmul.f32 %v138, %v780
    %v806 = vmul.f32 %v139, %v781
    %v807 = vmul.f32 %v140, %v782
    %v808 = vmul.f32 %v141, %v783
    %v809 = vmul.f32 %v142, %v784
    %v810 = vmul.f32 %v143, %v785
    %v811 = vadd.f32 %v735, %v786
    %v812 = vadd.f32 %v736, %v787
    %v813 = vadd.f32 %v737, %v788
    %v814 = vadd.f32 %v738, %v789
    %v815 = vadd.f32 %v739, %v790
    %v816 = vadd.f32 %v740, %v791
    %v817 = vadd.f32 %v741, %v792
    %v818 = vadd.f32 %v742, %v793
    %v819 = vadd.f32 %v743, %v794
    %v820 = vadd.f32 %v744, %v795
    %v821 = vadd.f32 %v745, %v796
    %v822 = vadd.f32 %v746, %v797
    %v823 = vadd.f32 %v747, %v798
    %v824 = vadd.f32 %v748, %v799
    %v825 = vadd.f32 %v749, %v800
    %v826 = vadd.f32 %v750, %v801
    %v827 = vadd.f32 %v751, %v802
    %v828 = vadd.f32 %v752, %v803
    %v829 = vadd.f32 %v753, %v804
    %v830 = vadd.f32 %v754, %v805
    %v831 = vadd.f32 %v755, %v806
    %v832 = vadd.f32 %v756, %v807
    %v833 = vadd.f32 %v757, %v808
    %v834 = vadd.f32 %v758, %v809
    %v835 = vadd.f32 %v759, %v810
    %s836 = scalar_lea.vmem [#allocation9], 400
    %v837 = vld [vmem:[%s836] sm:$0xff]
    %v838 = vld [vmem:[%s836 + $0x8] sm:$0xff]
    %v839 = vld [vmem:[%s836 + $0x10] sm:$0xff]
    %v840 = vld [vmem:[%s836 + $0x18] sm:$0xff]
    %v841 = vld [vmem:[%s836 + $0x20] sm:$0xff]
    %v842 = vld [vmem:[%s836 + $0x28] sm:$0xff]
    %v843 = vld [vmem:[%s836 + $0x30] sm:$0xff]
    %v844 = vld [vmem:[%s836 + $0x38] sm:$0xff]
    %v845 = vld [vmem:[%s836 + $0x40] sm:$0xff]
    %v846 = vld [vmem:[%s836 + $0x48] sm:$0xff]
    %v847 = vld [vmem:[%s836 + $0x50] sm:$0xff]
    %v848 = vld [vmem:[%s836 + $0x58] sm:$0xff]
    %v849 = vld [vmem:[%s836 + $0x60] sm:$0xff]
    %v850 = vld [vmem:[%s836 + $0x68] sm:$0xff]
    %v851 = vld [vmem:[%s836 + $0x70] sm:$0xff]
    %v852 = vld [vmem:[%s836 + $0x78] sm:$0xff]
    %v853 = vld [vmem:[%s836 + $0x80] sm:$0xff]
    %v854 = vld [vmem:[%s836 + $0x88] sm:$0xff]
    %v855 = vld [vmem:[%s836 + $0x90] sm:$0xff]
    %v856 = vld [vmem:[%s836 + $0x98] sm:$0xff]
    %v857 = vld [vmem:[%s836 + $0xa0] sm:$0xff]
    %v858 = vld [vmem:[%s836 + $0xa8] sm:$0xff]
    %v859 = vld [vmem:[%s836 + $0xb0] sm:$0xff]
    %v860 = vld [vmem:[%s836 + $0xb8] sm:$0xff]
    %v861 = vld [vmem:[%s836 + $0xc0] sm:$0xff]
    %v862 = vadd.f32 %v811, %v837
    %v863 = vadd.f32 %v812, %v838
    %v864 = vadd.f32 %v813, %v839
    %v865 = vadd.f32 %v814, %v840
    %v866 = vadd.f32 %v815, %v841
    %v867 = vadd.f32 %v816, %v842
    %v868 = vadd.f32 %v817, %v843
    %v869 = vadd.f32 %v818, %v844
    %v870 = vadd.f32 %v819, %v845
    %v871 = vadd.f32 %v820, %v846
    %v872 = vadd.f32 %v821, %v847
    %v873 = vadd.f32 %v822, %v848
    %v874 = vadd.f32 %v823, %v849
    %v875 = vadd.f32 %v824, %v850
    %v876 = vadd.f32 %v825, %v851
    %v877 = vadd.f32 %v826, %v852
    %v878 = vadd.f32 %v827, %v853
    %v879 = vadd.f32 %v828, %v854
    %v880 = vadd.f32 %v829, %v855
    %v881 = vadd.f32 %v830, %v856
    %v882 = vadd.f32 %v831, %v857
    %v883 = vadd.f32 %v832, %v858
    %v884 = vadd.f32 %v833, %v859
    %v885 = vadd.f32 %v834, %v860
    %v886 = vadd.f32 %v835, %v861
    %v887 = vmax.f32 %v862, 0.0
    %v888 = vmax.f32 %v863, 0.0
    %v889 = vmax.f32 %v864, 0.0
    %v890 = vmax.f32 %v865, 0.0
    %v891 = vmax.f32 %v866, 0.0
    %v892 = vmax.f32 %v867, 0.0
    %v893 = vmax.f32 %v868, 0.0
    %v894 = vmax.f32 %v869, 0.0
    %v895 = vmax.f32 %v870, 0.0
    %v896 = vmax.f32 %v871, 0.0
    %v897 = vmax.f32 %v872, 0.0
    %v898 = vmax.f32 %v873, 0.0
    %v899 = vmax.f32 %v874, 0.0
    %v900 = vmax.f32 %v875, 0.0
    %v901 = vmax.f32 %v876, 0.0
    %v902 = vmax.f32 %v877, 0.0
    %v903 = vmax.f32 %v878, 0.0
    %v904 = vmax.f32 %v879, 0.0
    %v905 = vmax.f32 %v880, 0.0
    %v906 = vmax.f32 %v881, 0.0
    %v907 = vmax.f32 %v882, 0.0
    %v908 = vmax.f32 %v883, 0.0
    %v909 = vmax.f32 %v884, 0.0
    %v910 = vmax.f32 %v885, 0.0
    %v911 = vmax.f32 %v886, 0.0
    %s912 = scalar_lea.vmem [#allocation11], 400
    %v913 = vld [vmem:[%s912] sm:$0xff]
    %v914 = vld [vmem:[%s912 + $0x8] sm:$0xff]
    %v915 = vld [vmem:[%s912 + $0x10] sm:$0xff]
    %v916 = vld [vmem:[%s912 + $0x18] sm:$0xff]
    %v917 = vld [vmem:[%s912 + $0x20] sm:$0xff]
    %v918 = vld [vmem:[%s912 + $0x28] sm:$0xff]
    %v919 = vld [vmem:[%s912 + $0x30] sm:$0xff]
    %v920 = vld [vmem:[%s912 + $0x38] sm:$0xff]
    %v921 = vld [vmem:[%s912 + $0x40] sm:$0xff]
    %v922 = vld [vmem:[%s912 + $0x48] sm:$0xff]
    %v923 = vld [vmem:[%s912 + $0x50] sm:$0xff]
    %v924 = vld [vmem:[%s912 + $0x58] sm:$0xff]
    %v925 = vld [vmem:[%s912 + $0x60] sm:$0xff]
    %v926 = vld [vmem:[%s912 + $0x68] sm:$0xff]
    %v927 = vld [vmem:[%s912 + $0x70] sm:$0xff]
    %v928 = vld [vmem:[%s912 + $0x78] sm:$0xff]
    %v929 = vld [vmem:[%s912 + $0x80] sm:$0xff]
    %v930 = vld [vmem:[%s912 + $0x88] sm:$0xff]
    %v931 = vld [vmem:[%s912 + $0x90] sm:$0xff]
    %v932 = vld [vmem:[%s912 + $0x98] sm:$0xff]
    %v933 = vld [vmem:[%s912 + $0xa0] sm:$0xff]
    %v934 = vld [vmem:[%s912 + $0xa8] sm:$0xff]
    %v935 = vld [vmem:[%s912 + $0xb0] sm:$0xff]
    %v936 = vld [vmem:[%s912 + $0xb8] sm:$0xff]
    %v937 = vld [vmem:[%s912 + $0xc0] sm:$0xff]
    %v938 = vmul.f32 %v887, %v913
    %v939 = vmul.f32 %v888, %v914
    %v940 = vmul.f32 %v889, %v915
    %v941 = vmul.f32 %v890, %v916
    %v942 = vmul.f32 %v891, %v917
    %v943 = vmul.f32 %v892, %v918
    %v944 = vmul.f32 %v893, %v919
    %v945 = vmul.f32 %v894, %v920
    %v946 = vmul.f32 %v895, %v921
    %v947 = vmul.f32 %v896, %v922
    %v948 = vmul.f32 %v897, %v923
    %v949 = vmul.f32 %v898, %v924
    %v950 = vmul.f32 %v899, %v925
    %v951 = vmul.f32 %v900, %v926
    %v952 = vmul.f32 %v901, %v927
    %v953 = vmul.f32 %v902, %v928
    %v954 = vmul.f32 %v903, %v929
    %v955 = vmul.f32 %v904, %v930
    %v956 = vmul.f32 %v905, %v931
    %v957 = vmul.f32 %v906, %v932
    %v958 = vmul.f32 %v907, %v933
    %v959 = vmul.f32 %v908, %v934
    %v960 = vmul.f32 %v909, %v935
    %v961 = vmul.f32 %v910, %v936
    %v962 = vmul.f32 %v911, %v937
    %v963 = vadd.f32 %v938, %v939
    %v964 = vadd.f32 %v963, %v940
    %v965 = vadd.f32 %v964, %v941
    %v966 = vadd.f32 %v965, %v942
    %v967 = vadd.f32 %v966, %v943
    %v968 = vadd.f32 %v967, %v944
    %v969 = vadd.f32 %v968, %v945
    %v970 = vadd.f32 %v969, %v946
    %v971 = vadd.f32 %v970, %v947
    %v972 = vadd.f32 %v971, %v948
    %v973 = vadd.f32 %v972, %v949
    %v974 = vadd.f32 %v973, %v950
    %v975 = vadd.f32 %v974, %v951
    %v976 = vadd.f32 %v975, %v952
    %v977 = vadd.f32 %v976, %v953
    %v978 = vadd.f32 %v977, %v954
    %v979 = vadd.f32 %v978, %v955
    %v980 = vadd.f32 %v979, %v956
    %v981 = vadd.f32 %v980, %v957
    %v982 = vadd.f32 %v981, %v958
    %v983 = vadd.f32 %v982, %v959
    %v984 = vadd.f32 %v983, %v960
    %v985 = vadd.f32 %v984, %v961
    %v986 = vadd.f32 %v985, %v962
    %v987 = vrot.slane %v986, 4
    %v988 = vadd.f32 %v986, %v987
    %v989 = vrot.slane %v988, 2
    %v990 = vadd.f32 %v988, %v989
    %v991 = vrot.slane %v990, 1
    %v992 = vadd.f32 %v990, %v991
    %v993 = vadd.f32 %v708, %v992
    %s994 = scalar_lea.vmem [#allocation6], 600
    %v995 = vld [vmem:[%s994] sm:$0xff]
    %v996 = vld [vmem:[%s994 + $0x8] sm:$0xff]
    %v997 = vld [vmem:[%s994 + $0x10] sm:$0xff]
    %v998 = vld [vmem:[%s994 + $0x18] sm:$0xff]
    %v999 = vld [vmem:[%s994 + $0x20] sm:$0xff]
    %v1000 = vld [vmem:[%s994 + $0x28] sm:$0xff]
    %v1001 = vld [vmem:[%s994 + $0x30] sm:$0xff]
    %v1002 = vld [vmem:[%s994 + $0x38] sm:$0xff]
    %v1003 = vld [vmem:[%s994 + $0x40] sm:$0xff]
    %v1004 = vld [vmem:[%s994 + $0x48] sm:$0xff]
    %v1005 = vld [vmem:[%s994 + $0x50] sm:$0xff]
    %v1006 = vld [vmem:[%s994 + $0x58] sm:$0xff]
    %v1007 = vld [vmem:[%s994 + $0x60] sm:$0xff]
    %v1008 = vld [vmem:[%s994 + $0x68] sm:$0xff]
    %v1009 = vld [vmem:[%s994 + $0x70] sm:$0xff]
    %v1010 = vld [vmem:[%s994 + $0x78] sm:$0xff]
    %v1011 = vld [vmem:[%s994 + $0x80] sm:$0xff]
    %v1012 = vld [vmem:[%s994 + $0x88] sm:$0xff]
    %v1013 = vld [vmem:[%s994 + $0x90] sm:$0xff]
    %v1014 = vld [vmem:[%s994 + $0x98] sm:$0xff]
    %v1015 = vld [vmem:[%s994 + $0xa0] sm:$0xff]
    %v1016 = vld [vmem:[%s994 + $0xa8] sm:$0xff]
    %v1017 = vld [vmem:[%s994 + $0xb0] sm:$0xff]
    %v1018 = vld [vmem:[%s994 + $0xb8] sm:$0xff]
    %v1019 = vld [vmem:[%s994 + $0xc0] sm:$0xff]
    %v1020 = vmul.f32 %v94, %v995
    %v1021 = vmul.f32 %v95, %v996
    %v1022 = vmul.f32 %v96, %v997
    %v1023 = vmul.f32 %v97, %v998
    %v1024 = vmul.f32 %v98, %v999
    %v1025 = vmul.f32 %v99, %v1000
    %v1026 = vmul.f32 %v100, %v1001
    %v1027 = vmul.f32 %v101, %v1002
    %v1028 = vmul.f32 %v102, %v1003
    %v1029 = vmul.f32 %v103, %v1004
    %v1030 = vmul.f32 %v104, %v1005
    %v1031 = vmul.f32 %v105, %v1006
    %v1032 = vmul.f32 %v106, %v1007
    %v1033 = vmul.f32 %v107, %v1008
    %v1034 = vmul.f32 %v108, %v1009
    %v1035 = vmul.f32 %v109, %v1010
    %v1036 = vmul.f32 %v110, %v1011
    %v1037 = vmul.f32 %v111, %v1012
    %v1038 = vmul.f32 %v112, %v1013
    %v1039 = vmul.f32 %v113, %v1014
    %v1040 = vmul.f32 %v114, %v1015
    %v1041 = vmul.f32 %v115, %v1016
    %v1042 = vmul.f32 %v116, %v1017
    %v1043 = vmul.f32 %v117, %v1018
    %v1044 = vmul.f32 %v118, %v1019
    %s1045 = scalar_lea.vmem [#allocation8], 600
    %v1046 = vld [vmem:[%s1045] sm:$0xff]
    %v1047 = vld [vmem:[%s1045 + $0x8] sm:$0xff]
    %v1048 = vld [vmem:[%s1045 + $0x10] sm:$0xff]
    %v1049 = vld [vmem:[%s1045 + $0x18] sm:$0xff]
    %v1050 = vld [vmem:[%s1045 + $0x20] sm:$0xff]
    %v1051 = vld [vmem:[%s1045 + $0x28] sm:$0xff]
    %v1052 = vld [vmem:[%s1045 + $0x30] sm:$0xff]
    %v1053 = vld [vmem:[%s1045 + $0x38] sm:$0xff]
    %v1054 = vld [vmem:[%s1045 + $0x40] sm:$0xff]
    %v1055 = vld [vmem:[%s1045 + $0x48] sm:$0xff]
    %v1056 = vld [vmem:[%s1045 + $0x50] sm:$0xff]
    %v1057 = vld [vmem:[%s1045 + $0x58] sm:$0xff]
    %v1058 = vld [vmem:[%s1045 + $0x60] sm:$0xff]
    %v1059 = vld [vmem:[%s1045 + $0x68] sm:$0xff]
    %v1060 = vld [vmem:[%s1045 + $0x70] sm:$0xff]
    %v1061 = vld [vmem:[%s1045 + $0x78] sm:$0xff]
    %v1062 = vld [vmem:[%s1045 + $0x80] sm:$0xff]
    %v1063 = vld [vmem:[%s1045 + $0x88] sm:$0xff]
    %v1064 = vld [vmem:[%s1045 + $0x90] sm:$0xff]
    %v1065 = vld [vmem:[%s1045 + $0x98] sm:$0xff]
    %v1066 = vld [vmem:[%s1045 + $0xa0] sm:$0xff]
    %v1067 = vld [vmem:[%s1045 + $0xa8] sm:$0xff]
    %v1068 = vld [vmem:[%s1045 + $0xb0] sm:$0xff]
    %v1069 = vld [vmem:[%s1045 + $0xb8] sm:$0xff]
    %v1070 = vld [vmem:[%s1045 + $0xc0] sm:$0xff]
    %v1071 = vmul.f32 %v119, %v1046
    %v1072 = vmul.f32 %v120, %v1047
    %v1073 = vmul.f32 %v121, %v1048
    %v1074 = vmul.f32 %v122, %v1049
    %v1075 = vmul.f32 %v123, %v1050
    %v1076 = vmul.f32 %v124, %v1051
    %v1077 = vmul.f32 %v125, %v1052
    %v1078 = vmul.f32 %v126, %v1053
    %v1079 = vmul.f32 %v127, %v1054
    %v1080 = vmul.f32 %v128, %v1055
    %v1081 = vmul.f32 %v129, %v1056
    %v1082 = vmul.f32 %v130, %v1057
    %v1083 = vmul.f32 %v131, %v1058
    %v1084 = vmul.f32 %v132, %v1059
    %v1085 = vmul.f32 %v133, %v1060
    %v1086 = vmul.f32 %v134, %v1061
    %v1087 = vmul.f32 %v135, %v1062
    %v1088 = vmul.f32 %v136, %v1063
    %v1089 = vmul.f32 %v137, %v1064
    %v1090 = vmul.f32 %v138, %v1065
    %v1091 = vmul.f32 %v139, %v1066
    %v1092 = vmul.f32 %v140, %v1067
    %v1093 = vmul.f32 %v141, %v1068
    %v1094 = vmul.f32 %v142, %v1069
    %v1095 = vmul.f32 %v143, %v1070
    %v1096 = vadd.f32 %v1020, %v1071
    %v1097 = vadd.f32 %v1021, %v1072
    %v1098 = vadd.f32 %v1022, %v1073
    %v1099 = vadd.f32 %v1023, %v1074
    %v1100 = vadd.f32 %v1024, %v1075
    %v1101 = vadd.f32 %v1025, %v1076
    %v1102 = vadd.f32 %v1026, %v1077
    %v1103 = vadd.f32 %v1027, %v1078
    %v1104 = vadd.f32 %v1028, %v1079
    %v1105 = vadd.f32 %v1029, %v1080
    %v1106 = vadd.f32 %v1030, %v1081
    %v1107 = vadd.f32 %v1031, %v1082
    %v1108 = vadd.f32 %v1032, %v1083
    %v1109 = vadd.f32 %v1033, %v1084
    %v1110 = vadd.f32 %v1034, %v1085
    %v1111 = vadd.f32 %v1035, %v1086
    %v1112 = vadd.f32 %v1036, %v1087
    %v1113 = vadd.f32 %v1037, %v1088
    %v1114 = vadd.f32 %v1038, %v1089
    %v1115 = vadd.f32 %v1039, %v1090
    %v1116 = vadd.f32 %v1040, %v1091
    %v1117 = vadd.f32 %v1041, %v1092
    %v1118 = vadd.f32 %v1042, %v1093
    %v1119 = vadd.f32 %v1043, %v1094
    %v1120 = vadd.f32 %v1044, %v1095
    %s1121 = scalar_lea.vmem [#allocation9], 600
    %v1122 = vld [vmem:[%s1121] sm:$0xff]
    %v1123 = vld [vmem:[%s1121 + $0x8] sm:$0xff]
    %v1124 = vld [vmem:[%s1121 + $0x10] sm:$0xff]
    %v1125 = vld [vmem:[%s1121 + $0x18] sm:$0xff]
    %v1126 = vld [vmem:[%s1121 + $0x20] sm:$0xff]
    %v1127 = vld [vmem:[%s1121 + $0x28] sm:$0xff]
    %v1128 = vld [vmem:[%s1121 + $0x30] sm:$0xff]
    %v1129 = vld [vmem:[%s1121 + $0x38] sm:$0xff]
    %v1130 = vld [vmem:[%s1121 + $0x40] sm:$0xff]
    %v1131 = vld [vmem:[%s1121 + $0x48] sm:$0xff]
    %v1132 = vld [vmem:[%s1121 + $0x50] sm:$0xff]
    %v1133 = vld [vmem:[%s1121 + $0x58] sm:$0xff]
    %v1134 = vld [vmem:[%s1121 + $0x60] sm:$0xff]
    %v1135 = vld [vmem:[%s1121 + $0x68] sm:$0xff]
    %v1136 = vld [vmem:[%s1121 + $0x70] sm:$0xff]
    %v1137 = vld [vmem:[%s1121 + $0x78] sm:$0xff]
    %v1138 = vld [vmem:[%s1121 + $0x80] sm:$0xff]
    %v1139 = vld [vmem:[%s1121 + $0x88] sm:$0xff]
    %v1140 = vld [vmem:[%s1121 + $0x90] sm:$0xff]
    %v1141 = vld [vmem:[%s1121 + $0x98] sm:$0xff]
    %v1142 = vld [vmem:[%s1121 + $0xa0] sm:$0xff]
    %v1143 = vld [vmem:[%s1121 + $0xa8] sm:$0xff]
    %v1144 = vld [vmem:[%s1121 + $0xb0] sm:$0xff]
    %v1145 = vld [vmem:[%s1121 + $0xb8] sm:$0xff]
    %v1146 = vld [vmem:[%s1121 + $0xc0] sm:$0xff]
    %v1147 = vadd.f32 %v1096, %v1122
    %v1148 = vadd.f32 %v1097, %v1123
    %v1149 = vadd.f32 %v1098, %v1124
    %v1150 = vadd.f32 %v1099, %v1125
    %v1151 = vadd.f32 %v1100, %v1126
    %v1152 = vadd.f32 %v1101, %v1127
    %v1153 = vadd.f32 %v1102, %v1128
    %v1154 = vadd.f32 %v1103, %v1129
    %v1155 = vadd.f32 %v1104, %v1130
    %v1156 = vadd.f32 %v1105, %v1131
    %v1157 = vadd.f32 %v1106, %v1132
    %v1158 = vadd.f32 %v1107, %v1133
    %v1159 = vadd.f32 %v1108, %v1134
    %v1160 = vadd.f32 %v1109, %v1135
    %v1161 = vadd.f32 %v1110, %v1136
    %v1162 = vadd.f32 %v1111, %v1137
    %v1163 = vadd.f32 %v1112, %v1138
    %v1164 = vadd.f32 %v1113, %v1139
    %v1165 = vadd.f32 %v1114, %v1140
    %v1166 = vadd.f32 %v1115, %v1141
    %v1167 = vadd.f32 %v1116, %v1142
    %v1168 = vadd.f32 %v1117, %v1143
    %v1169 = vadd.f32 %v1118, %v1144
    %v1170 = vadd.f32 %v1119, %v1145
    %v1171 = vadd.f32 %v1120, %v1146
    %v1172 = vmax.f32 %v1147, 0.0
    %v1173 = vmax.f32 %v1148, 0.0
    %v1174 = vmax.f32 %v1149, 0.0
    %v1175 = vmax.f32 %v1150, 0.0
    %v1176 = vmax.f32 %v1151, 0.0
    %v1177 = vmax.f32 %v1152, 0.0
    %v1178 = vmax.f32 %v1153, 0.0
    %v1179 = vmax.f32 %v1154, 0.0
    %v1180 = vmax.f32 %v1155, 0.0
    %v1181 = vmax.f32 %v1156, 0.0
    %v1182 = vmax.f32 %v1157, 0.0
    %v1183 = vmax.f32 %v1158, 0.0
    %v1184 = vmax.f32 %v1159, 0.0
    %v1185 = vmax.f32 %v1160, 0.0
    %v1186 = vmax.f32 %v1161, 0.0
    %v1187 = vmax.f32 %v1162, 0.0
    %v1188 = vmax.f32 %v1163, 0.0
    %v1189 = vmax.f32 %v1164, 0.0
    %v1190 = vmax.f32 %v1165, 0.0
    %v1191 = vmax.f32 %v1166, 0.0
    %v1192 = vmax.f32 %v1167, 0.0
    %v1193 = vmax.f32 %v1168, 0.0
    %v1194 = vmax.f32 %v1169, 0.0
    %v1195 = vmax.f32 %v1170, 0.0
    %v1196 = vmax.f32 %v1171, 0.0
    %s1197 = scalar_lea.vmem [#allocation11], 600
    %v1198 = vld [vmem:[%s1197] sm:$0xff]
    %v1199 = vld [vmem:[%s1197 + $0x8] sm:$0xff]
    %v1200 = vld [vmem:[%s1197 + $0x10] sm:$0xff]
    %v1201 = vld [vmem:[%s1197 + $0x18] sm:$0xff]
    %v1202 = vld [vmem:[%s1197 + $0x20] sm:$0xff]
    %v1203 = vld [vmem:[%s1197 + $0x28] sm:$0xff]
    %v1204 = vld [vmem:[%s1197 + $0x30] sm:$0xff]
    %v1205 = vld [vmem:[%s1197 + $0x38] sm:$0xff]
    %v1206 = vld [vmem:[%s1197 + $0x40] sm:$0xff]
    %v1207 = vld [vmem:[%s1197 + $0x48] sm:$0xff]
    %v1208 = vld [vmem:[%s1197 + $0x50] sm:$0xff]
    %v1209 = vld [vmem:[%s1197 + $0x58] sm:$0xff]
    %v1210 = vld [vmem:[%s1197 + $0x60] sm:$0xff]
    %v1211 = vld [vmem:[%s1197 + $0x68] sm:$0xff]
    %v1212 = vld [vmem:[%s1197 + $0x70] sm:$0xff]
    %v1213 = vld [vmem:[%s1197 + $0x78] sm:$0xff]
    %v1214 = vld [vmem:[%s1197 + $0x80] sm:$0xff]
    %v1215 = vld [vmem:[%s1197 + $0x88] sm:$0xff]
    %v1216 = vld [vmem:[%s1197 + $0x90] sm:$0xff]
    %v1217 = vld [vmem:[%s1197 + $0x98] sm:$0xff]
    %v1218 = vld [vmem:[%s1197 + $0xa0] sm:$0xff]
    %v1219 = vld [vmem:[%s1197 + $0xa8] sm:$0xff]
    %v1220 = vld [vmem:[%s1197 + $0xb0] sm:$0xff]
    %v1221 = vld [vmem:[%s1197 + $0xb8] sm:$0xff]
    %v1222 = vld [vmem:[%s1197 + $0xc0] sm:$0xff]
    %v1223 = vmul.f32 %v1172, %v1198
    %v1224 = vmul.f32 %v1173, %v1199
    %v1225 = vmul.f32 %v1174, %v1200
    %v1226 = vmul.f32 %v1175, %v1201
    %v1227 = vmul.f32 %v1176, %v1202
    %v1228 = vmul.f32 %v1177, %v1203
    %v1229 = vmul.f32 %v1178, %v1204
    %v1230 = vmul.f32 %v1179, %v1205
    %v1231 = vmul.f32 %v1180, %v1206
    %v1232 = vmul.f32 %v1181, %v1207
    %v1233 = vmul.f32 %v1182, %v1208
    %v1234 = vmul.f32 %v1183, %v1209
    %v1235 = vmul.f32 %v1184, %v1210
    %v1236 = vmul.f32 %v1185, %v1211
    %v1237 = vmul.f32 %v1186, %v1212
    %v1238 = vmul.f32 %v1187, %v1213
    %v1239 = vmul.f32 %v1188, %v1214
    %v1240 = vmul.f32 %v1189, %v1215
    %v1241 = vmul.f32 %v1190, %v1216
    %v1242 = vmul.f32 %v1191, %v1217
    %v1243 = vmul.f32 %v1192, %v1218
    %v1244 = vmul.f32 %v1193, %v1219
    %v1245 = vmul.f32 %v1194, %v1220
    %v1246 = vmul.f32 %v1195, %v1221
    %v1247 = vmul.f32 %v1196, %v1222
    %v1248 = vadd.f32 %v1223, %v1224
    %v1249 = vadd.f32 %v1248, %v1225
    %v1250 = vadd.f32 %v1249, %v1226
    %v1251 = vadd.f32 %v1250, %v1227
    %v1252 = vadd.f32 %v1251, %v1228
    %v1253 = vadd.f32 %v1252, %v1229
    %v1254 = vadd.f32 %v1253, %v1230
    %v1255 = vadd.f32 %v1254, %v1231
    %v1256 = vadd.f32 %v1255, %v1232
    %v1257 = vadd.f32 %v1256, %v1233
    %v1258 = vadd.f32 %v1257, %v1234
    %v1259 = vadd.f32 %v1258, %v1235
    %v1260 = vadd.f32 %v1259, %v1236
    %v1261 = vadd.f32 %v1260, %v1237
    %v1262 = vadd.f32 %v1261, %v1238
    %v1263 = vadd.f32 %v1262, %v1239
    %v1264 = vadd.f32 %v1263, %v1240
    %v1265 = vadd.f32 %v1264, %v1241
    %v1266 = vadd.f32 %v1265, %v1242
    %v1267 = vadd.f32 %v1266, %v1243
    %v1268 = vadd.f32 %v1267, %v1244
    %v1269 = vadd.f32 %v1268, %v1245
    %v1270 = vadd.f32 %v1269, %v1246
    %v1271 = vadd.f32 %v1270, %v1247
    %v1272 = vrot.slane %v1271, 4
    %v1273 = vadd.f32 %v1271, %v1272
    %v1274 = vrot.slane %v1273, 2
    %v1275 = vadd.f32 %v1273, %v1274
    %v1276 = vrot.slane %v1275, 1
    %v1277 = vadd.f32 %v1275, %v1276
    %v1278 = vadd.f32 %v993, %v1277
    %s1279 = scalar_lea.vmem [#allocation6], 800
    %v1280 = vld [vmem:[%s1279] sm:$0xff]
    %v1281 = vld [vmem:[%s1279 + $0x8] sm:$0xff]
    %v1282 = vld [vmem:[%s1279 + $0x10] sm:$0xff]
    %v1283 = vld [vmem:[%s1279 + $0x18] sm:$0xff]
    %v1284 = vld [vmem:[%s1279 + $0x20] sm:$0xff]
    %v1285 = vld [vmem:[%s1279 + $0x28] sm:$0xff]
    %v1286 = vld [vmem:[%s1279 + $0x30] sm:$0xff]
    %v1287 = vld [vmem:[%s1279 + $0x38] sm:$0xff]
    %v1288 = vld [vmem:[%s1279 + $0x40] sm:$0xff]
    %v1289 = vld [vmem:[%s1279 + $0x48] sm:$0xff]
    %v1290 = vld [vmem:[%s1279 + $0x50] sm:$0xff]
    %v1291 = vld [vmem:[%s1279 + $0x58] sm:$0xff]
    %v1292 = vld [vmem:[%s1279 + $0x60] sm:$0xff]
    %v1293 = vld [vmem:[%s1279 + $0x68] sm:$0xff]
    %v1294 = vld [vmem:[%s1279 + $0x70] sm:$0xff]
    %v1295 = vld [vmem:[%s1279 + $0x78] sm:$0xff]
    %v1296 = vld [vmem:[%s1279 + $0x80] sm:$0xff]
    %v1297 = vld [vmem:[%s1279 + $0x88] sm:$0xff]
    %v1298 = vld [vmem:[%s1279 + $0x90] sm:$0xff]
    %v1299 = vld [vmem:[%s1279 + $0x98] sm:$0xff]
    %v1300 = vld [vmem:[%s1279 + $0xa0] sm:$0xff]
    %v1301 = vld [vmem:[%s1279 + $0xa8] sm:$0xff]
    %v1302 = vld [vmem:[%s1279 + $0xb0] sm:$0xff]
    %v1303 = vld [vmem:[%s1279 + $0xb8] sm:$0xff]
    %v1304 = vld [vmem:[%s1279 + $0xc0] sm:$0xff]
    %v1305 = vmul.f32 %v94, %v1280
    %v1306 = vmul.f32 %v95, %v1281
    %v1307 = vmul.f32 %v96, %v1282
    %v1308 = vmul.f32 %v97, %v1283
    %v1309 = vmul.f32 %v98, %v1284
    %v1310 = vmul.f32 %v99, %v1285
    %v1311 = vmul.f32 %v100, %v1286
    %v1312 = vmul.f32 %v101, %v1287
    %v1313 = vmul.f32 %v102, %v1288
    %v1314 = vmul.f32 %v103, %v1289
    %v1315 = vmul.f32 %v104, %v1290
    %v1316 = vmul.f32 %v105, %v1291
    %v1317 = vmul.f32 %v106, %v1292
    %v1318 = vmul.f32 %v107, %v1293
    %v1319 = vmul.f32 %v108, %v1294
    %v1320 = vmul.f32 %v109, %v1295
    %v1321 = vmul.f32 %v110, %v1296
    %v1322 = vmul.f32 %v111, %v1297
    %v1323 = vmul.f32 %v112, %v1298
    %v1324 = vmul.f32 %v113, %v1299
    %v1325 = vmul.f32 %v114, %v1300
    %v1326 = vmul.f32 %v115, %v1301
    %v1327 = vmul.f32 %v116, %v1302
    %v1328 = vmul.f32 %v117, %v1303
    %v1329 = vmul.f32 %v118, %v1304
    %s1330 = scalar_lea.vmem [#allocation8], 800
    %v1331 = vld [vmem:[%s1330] sm:$0xff]
    %v1332 = vld [vmem:[%s1330 + $0x8] sm:$0xff]
    %v1333 = vld [vmem:[%s1330 + $0x10] sm:$0xff]
    %v1334 = vld [vmem:[%s1330 + $0x18] sm:$0xff]
    %v1335 = vld [vmem:[%s1330 + $0x20] sm:$0xff]
    %v1336 = vld [vmem:[%s1330 + $0x28] sm:$0xff]
    %v1337 = vld [vmem:[%s1330 + $0x30] sm:$0xff]
    %v1338 = vld [vmem:[%s1330 + $0x38] sm:$0xff]
    %v1339 = vld [vmem:[%s1330 + $0x40] sm:$0xff]
    %v1340 = vld [vmem:[%s1330 + $0x48] sm:$0xff]
    %v1341 = vld [vmem:[%s1330 + $0x50] sm:$0xff]
    %v1342 = vld [vmem:[%s1330 + $0x58] sm:$0xff]
    %v1343 = vld [vmem:[%s1330 + $0x60] sm:$0xff]
    %v1344 = vld [vmem:[%s1330 + $0x68] sm:$0xff]
    %v1345 = vld [vmem:[%s1330 + $0x70] sm:$0xff]
    %v1346 = vld [vmem:[%s1330 + $0x78] sm:$0xff]
    %v1347 = vld [vmem:[%s1330 + $0x80] sm:$0xff]
    %v1348 = vld [vmem:[%s1330 + $0x88] sm:$0xff]
    %v1349 = vld [vmem:[%s1330 + $0x90] sm:$0xff]
    %v1350 = vld [vmem:[%s1330 + $0x98] sm:$0xff]
    %v1351 = vld [vmem:[%s1330 + $0xa0] sm:$0xff]
    %v1352 = vld [vmem:[%s1330 + $0xa8] sm:$0xff]
    %v1353 = vld [vmem:[%s1330 + $0xb0] sm:$0xff]
    %v1354 = vld [vmem:[%s1330 + $0xb8] sm:$0xff]
    %v1355 = vld [vmem:[%s1330 + $0xc0] sm:$0xff]
    %v1356 = vmul.f32 %v119, %v1331
    %v1357 = vmul.f32 %v120, %v1332
    %v1358 = vmul.f32 %v121, %v1333
    %v1359 = vmul.f32 %v122, %v1334
    %v1360 = vmul.f32 %v123, %v1335
    %v1361 = vmul.f32 %v124, %v1336
    %v1362 = vmul.f32 %v125, %v1337
    %v1363 = vmul.f32 %v126, %v1338
    %v1364 = vmul.f32 %v127, %v1339
    %v1365 = vmul.f32 %v128, %v1340
    %v1366 = vmul.f32 %v129, %v1341
    %v1367 = vmul.f32 %v130, %v1342
    %v1368 = vmul.f32 %v131, %v1343
    %v1369 = vmul.f32 %v132, %v1344
    %v1370 = vmul.f32 %v133, %v1345
    %v1371 = vmul.f32 %v134, %v1346
    %v1372 = vmul.f32 %v135, %v1347
    %v1373 = vmul.f32 %v136, %v1348
    %v1374 = vmul.f32 %v137, %v1349
    %v1375 = vmul.f32 %v138, %v1350
    %v1376 = vmul.f32 %v139, %v1351
    %v1377 = vmul.f32 %v140, %v1352
    %v1378 = vmul.f32 %v141, %v1353
    %v1379 = vmul.f32 %v142, %v1354
    %v1380 = vmul.f32 %v143, %v1355
    %v1381 = vadd.f32 %v1305, %v1356
    %v1382 = vadd.f32 %v1306, %v1357
    %v1383 = vadd.f32 %v1307, %v1358
    %v1384 = vadd.f32 %v1308, %v1359
    %v1385 = vadd.f32 %v1309, %v1360
    %v1386 = vadd.f32 %v1310, %v1361
    %v1387 = vadd.f32 %v1311, %v1362
    %v1388 = vadd.f32 %v1312, %v1363
    %v1389 = vadd.f32 %v1313, %v1364
    %v1390 = vadd.f32 %v1314, %v1365
    %v1391 = vadd.f32 %v1315, %v1366
    %v1392 = vadd.f32 %v1316, %v1367
    %v1393 = vadd.f32 %v1317, %v1368
    %v1394 = vadd.f32 %v1318, %v1369
    %v1395 = vadd.f32 %v1319, %v1370
    %v1396 = vadd.f32 %v1320, %v1371
    %v1397 = vadd.f32 %v1321, %v1372
    %v1398 = vadd.f32 %v1322, %v1373
    %v1399 = vadd.f32 %v1323, %v1374
    %v1400 = vadd.f32 %v1324, %v1375
    %v1401 = vadd.f32 %v1325, %v1376
    %v1402 = vadd.f32 %v1326, %v1377
    %v1403 = vadd.f32 %v1327, %v1378
    %v1404 = vadd.f32 %v1328, %v1379
    %v1405 = vadd.f32 %v1329, %v1380
    %s1406 = scalar_lea.vmem [#allocation9], 800
    %v1407 = vld [vmem:[%s1406] sm:$0xff]
    %v1408 = vld [vmem:[%s1406 + $0x8] sm:$0xff]
    %v1409 = vld [vmem:[%s1406 + $0x10] sm:$0xff]
    %v1410 = vld [vmem:[%s1406 + $0x18] sm:$0xff]
    %v1411 = vld [vmem:[%s1406 + $0x20] sm:$0xff]
    %v1412 = vld [vmem:[%s1406 + $0x28] sm:$0xff]
    %v1413 = vld [vmem:[%s1406 + $0x30] sm:$0xff]
    %v1414 = vld [vmem:[%s1406 + $0x38] sm:$0xff]
    %v1415 = vld [vmem:[%s1406 + $0x40] sm:$0xff]
    %v1416 = vld [vmem:[%s1406 + $0x48] sm:$0xff]
    %v1417 = vld [vmem:[%s1406 + $0x50] sm:$0xff]
    %v1418 = vld [vmem:[%s1406 + $0x58] sm:$0xff]
    %v1419 = vld [vmem:[%s1406 + $0x60] sm:$0xff]
    %v1420 = vld [vmem:[%s1406 + $0x68] sm:$0xff]
    %v1421 = vld [vmem:[%s1406 + $0x70] sm:$0xff]
    %v1422 = vld [vmem:[%s1406 + $0x78] sm:$0xff]
    %v1423 = vld [vmem:[%s1406 + $0x80] sm:$0xff]
    %v1424 = vld [vmem:[%s1406 + $0x88] sm:$0xff]
    %v1425 = vld [vmem:[%s1406 + $0x90] sm:$0xff]
    %v1426 = vld [vmem:[%s1406 + $0x98] sm:$0xff]
    %v1427 = vld [vmem:[%s1406 + $0xa0] sm:$0xff]
    %v1428 = vld [vmem:[%s1406 + $0xa8] sm:$0xff]
    %v1429 = vld [vmem:[%s1406 + $0xb0] sm:$0xff]
    %v1430 = vld [vmem:[%s1406 + $0xb8] sm:$0xff]
    %v1431 = vld [vmem:[%s1406 + $0xc0] sm:$0xff]
    %v1432 = vadd.f32 %v1381, %v1407
    %v1433 = vadd.f32 %v1382, %v1408
    %v1434 = vadd.f32 %v1383, %v1409
    %v1435 = vadd.f32 %v1384, %v1410
    %v1436 = vadd.f32 %v1385, %v1411
    %v1437 = vadd.f32 %v1386, %v1412
    %v1438 = vadd.f32 %v1387, %v1413
    %v1439 = vadd.f32 %v1388, %v1414
    %v1440 = vadd.f32 %v1389, %v1415
    %v1441 = vadd.f32 %v1390, %v1416
    %v1442 = vadd.f32 %v1391, %v1417
    %v1443 = vadd.f32 %v1392, %v1418
    %v1444 = vadd.f32 %v1393, %v1419
    %v1445 = vadd.f32 %v1394, %v1420
    %v1446 = vadd.f32 %v1395, %v1421
    %v1447 = vadd.f32 %v1396, %v1422
    %v1448 = vadd.f32 %v1397, %v1423
    %v1449 = vadd.f32 %v1398, %v1424
    %v1450 = vadd.f32 %v1399, %v1425
    %v1451 = vadd.f32 %v1400, %v1426
    %v1452 = vadd.f32 %v1401, %v1427
    %v1453 = vadd.f32 %v1402, %v1428
    %v1454 = vadd.f32 %v1403, %v1429
    %v1455 = vadd.f32 %v1404, %v1430
    %v1456 = vadd.f32 %v1405, %v1431
    %v1457 = vmax.f32 %v1432, 0.0
    %v1458 = vmax.f32 %v1433, 0.0
    %v1459 = vmax.f32 %v1434, 0.0
    %v1460 = vmax.f32 %v1435, 0.0
    %v1461 = vmax.f32 %v1436, 0.0
    %v1462 = vmax.f32 %v1437, 0.0
    %v1463 = vmax.f32 %v1438, 0.0
    %v1464 = vmax.f32 %v1439, 0.0
    %v1465 = vmax.f32 %v1440, 0.0
    %v1466 = vmax.f32 %v1441, 0.0
    %v1467 = vmax.f32 %v1442, 0.0
    %v1468 = vmax.f32 %v1443, 0.0
    %v1469 = vmax.f32 %v1444, 0.0
    %v1470 = vmax.f32 %v1445, 0.0
    %v1471 = vmax.f32 %v1446, 0.0
    %v1472 = vmax.f32 %v1447, 0.0
    %v1473 = vmax.f32 %v1448, 0.0
    %v1474 = vmax.f32 %v1449, 0.0
    %v1475 = vmax.f32 %v1450, 0.0
    %v1476 = vmax.f32 %v1451, 0.0
    %v1477 = vmax.f32 %v1452, 0.0
    %v1478 = vmax.f32 %v1453, 0.0
    %v1479 = vmax.f32 %v1454, 0.0
    %v1480 = vmax.f32 %v1455, 0.0
    %v1481 = vmax.f32 %v1456, 0.0
    %s1482 = scalar_lea.vmem [#allocation11], 800
    %v1483 = vld [vmem:[%s1482] sm:$0xff]
    %v1484 = vld [vmem:[%s1482 + $0x8] sm:$0xff]
    %v1485 = vld [vmem:[%s1482 + $0x10] sm:$0xff]
    %v1486 = vld [vmem:[%s1482 + $0x18] sm:$0xff]
    %v1487 = vld [vmem:[%s1482 + $0x20] sm:$0xff]
    %v1488 = vld [vmem:[%s1482 + $0x28] sm:$0xff]
    %v1489 = vld [vmem:[%s1482 + $0x30] sm:$0xff]
    %v1490 = vld [vmem:[%s1482 + $0x38] sm:$0xff]
    %v1491 = vld [vmem:[%s1482 + $0x40] sm:$0xff]
    %v1492 = vld [vmem:[%s1482 + $0x48] sm:$0xff]
    %v1493 = vld [vmem:[%s1482 + $0x50] sm:$0xff]
    %v1494 = vld [vmem:[%s1482 + $0x58] sm:$0xff]
    %v1495 = vld [vmem:[%s1482 + $0x60] sm:$0xff]
    %v1496 = vld [vmem:[%s1482 + $0x68] sm:$0xff]
    %v1497 = vld [vmem:[%s1482 + $0x70] sm:$0xff]
    %v1498 = vld [vmem:[%s1482 + $0x78] sm:$0xff]
    %v1499 = vld [vmem:[%s1482 + $0x80] sm:$0xff]
    %v1500 = vld [vmem:[%s1482 + $0x88] sm:$0xff]
    %v1501 = vld [vmem:[%s1482 + $0x90] sm:$0xff]
    %v1502 = vld [vmem:[%s1482 + $0x98] sm:$0xff]
    %v1503 = vld [vmem:[%s1482 + $0xa0] sm:$0xff]
    %v1504 = vld [vmem:[%s1482 + $0xa8] sm:$0xff]
    %v1505 = vld [vmem:[%s1482 + $0xb0] sm:$0xff]
    %v1506 = vld [vmem:[%s1482 + $0xb8] sm:$0xff]
    %v1507 = vld [vmem:[%s1482 + $0xc0] sm:$0xff]
    %v1508 = vmul.f32 %v1457, %v1483
    %v1509 = vmul.f32 %v1458, %v1484
    %v1510 = vmul.f32 %v1459, %v1485
    %v1511 = vmul.f32 %v1460, %v1486
    %v1512 = vmul.f32 %v1461, %v1487
    %v1513 = vmul.f32 %v1462, %v1488
    %v1514 = vmul.f32 %v1463, %v1489
    %v1515 = vmul.f32 %v1464, %v1490
    %v1516 = vmul.f32 %v1465, %v1491
    %v1517 = vmul.f32 %v1466, %v1492
    %v1518 = vmul.f32 %v1467, %v1493
    %v1519 = vmul.f32 %v1468, %v1494
    %v1520 = vmul.f32 %v1469, %v1495
    %v1521 = vmul.f32 %v1470, %v1496
    %v1522 = vmul.f32 %v1471, %v1497
    %v1523 = vmul.f32 %v1472, %v1498
    %v1524 = vmul.f32 %v1473, %v1499
    %v1525 = vmul.f32 %v1474, %v1500
    %v1526 = vmul.f32 %v1475, %v1501
    %v1527 = vmul.f32 %v1476, %v1502
    %v1528 = vmul.f32 %v1477, %v1503
    %v1529 = vmul.f32 %v1478, %v1504
    %v1530 = vmul.f32 %v1479, %v1505
    %v1531 = vmul.f32 %v1480, %v1506
    %v1532 = vmul.f32 %v1481, %v1507
    %v1533 = vadd.f32 %v1508, %v1509
    %v1534 = vadd.f32 %v1533, %v1510
    %v1535 = vadd.f32 %v1534, %v1511
    %v1536 = vadd.f32 %v1535, %v1512
    %v1537 = vadd.f32 %v1536, %v1513
    %v1538 = vadd.f32 %v1537, %v1514
    %v1539 = vadd.f32 %v1538, %v1515
    %v1540 = vadd.f32 %v1539, %v1516
    %v1541 = vadd.f32 %v1540, %v1517
    %v1542 = vadd.f32 %v1541, %v1518
    %v1543 = vadd.f32 %v1542, %v1519
    %v1544 = vadd.f32 %v1543, %v1520
    %v1545 = vadd.f32 %v1544, %v1521
    %v1546 = vadd.f32 %v1545, %v1522
    %v1547 = vadd.f32 %v1546, %v1523
    %v1548 = vadd.f32 %v1547, %v1524
    %v1549 = vadd.f32 %v1548, %v1525
    %v1550 = vadd.f32 %v1549, %v1526
    %v1551 = vadd.f32 %v1550, %v1527
    %v1552 = vadd.f32 %v1551, %v1528
    %v1553 = vadd.f32 %v1552, %v1529
    %v1554 = vadd.f32 %v1553, %v1530
    %v1555 = vadd.f32 %v1554, %v1531
    %v1556 = vadd.f32 %v1555, %v1532
    %v1557 = vrot.slane %v1556, 4
    %v1558 = vadd.f32 %v1556, %v1557
    %v1559 = vrot.slane %v1558, 2
    %v1560 = vadd.f32 %v1558, %v1559
    %v1561 = vrot.slane %v1560, 1
    %v1562 = vadd.f32 %v1560, %v1561
    %v1563 = vadd.f32 %v1278, %v1562
    %s1564 = scalar_lea.vmem [#allocation6], 1000
    %v1565 = vld [vmem:[%s1564] sm:$0xff]
    %v1566 = vld [vmem:[%s1564 + $0x8] sm:$0xff]
    %v1567 = vld [vmem:[%s1564 + $0x10] sm:$0xff]
    %v1568 = vld [vmem:[%s1564 + $0x18] sm:$0xff]
    %v1569 = vld [vmem:[%s1564 + $0x20] sm:$0xff]
    %v1570 = vld [vmem:[%s1564 + $0x28] sm:$0xff]
    %v1571 = vld [vmem:[%s1564 + $0x30] sm:$0xff]
    %v1572 = vld [vmem:[%s1564 + $0x38] sm:$0xff]
    %v1573 = vld [vmem:[%s1564 + $0x40] sm:$0xff]
    %v1574 = vld [vmem:[%s1564 + $0x48] sm:$0xff]
    %v1575 = vld [vmem:[%s1564 + $0x50] sm:$0xff]
    %v1576 = vld [vmem:[%s1564 + $0x58] sm:$0xff]
    %v1577 = vld [vmem:[%s1564 + $0x60] sm:$0xff]
    %v1578 = vld [vmem:[%s1564 + $0x68] sm:$0xff]
    %v1579 = vld [vmem:[%s1564 + $0x70] sm:$0xff]
    %v1580 = vld [vmem:[%s1564 + $0x78] sm:$0xff]
    %v1581 = vld [vmem:[%s1564 + $0x80] sm:$0xff]
    %v1582 = vld [vmem:[%s1564 + $0x88] sm:$0xff]
    %v1583 = vld [vmem:[%s1564 + $0x90] sm:$0xff]
    %v1584 = vld [vmem:[%s1564 + $0x98] sm:$0xff]
    %v1585 = vld [vmem:[%s1564 + $0xa0] sm:$0xff]
    %v1586 = vld [vmem:[%s1564 + $0xa8] sm:$0xff]
    %v1587 = vld [vmem:[%s1564 + $0xb0] sm:$0xff]
    %v1588 = vld [vmem:[%s1564 + $0xb8] sm:$0xff]
    %v1589 = vld [vmem:[%s1564 + $0xc0] sm:$0xff]
    %v1590 = vmul.f32 %v94, %v1565
    %v1591 = vmul.f32 %v95, %v1566
    %v1592 = vmul.f32 %v96, %v1567
    %v1593 = vmul.f32 %v97, %v1568
    %v1594 = vmul.f32 %v98, %v1569
    %v1595 = vmul.f32 %v99, %v1570
    %v1596 = vmul.f32 %v100, %v1571
    %v1597 = vmul.f32 %v101, %v1572
    %v1598 = vmul.f32 %v102, %v1573
    %v1599 = vmul.f32 %v103, %v1574
    %v1600 = vmul.f32 %v104, %v1575
    %v1601 = vmul.f32 %v105, %v1576
    %v1602 = vmul.f32 %v106, %v1577
    %v1603 = vmul.f32 %v107, %v1578
    %v1604 = vmul.f32 %v108, %v1579
    %v1605 = vmul.f32 %v109, %v1580
    %v1606 = vmul.f32 %v110, %v1581
    %v1607 = vmul.f32 %v111, %v1582
    %v1608 = vmul.f32 %v112, %v1583
    %v1609 = vmul.f32 %v113, %v1584
    %v1610 = vmul.f32 %v114, %v1585
    %v1611 = vmul.f32 %v115, %v1586
    %v1612 = vmul.f32 %v116, %v1587
    %v1613 = vmul.f32 %v117, %v1588
    %v1614 = vmul.f32 %v118, %v1589
    %s1615 = scalar_lea.vmem [#allocation8], 1000
    %v1616 = vld [vmem:[%s1615] sm:$0xff]
    %v1617 = vld [vmem:[%s1615 + $0x8] sm:$0xff]
    %v1618 = vld [vmem:[%s1615 + $0x10] sm:$0xff]
    %v1619 = vld [vmem:[%s1615 + $0x18] sm:$0xff]
    %v1620 = vld [vmem:[%s1615 + $0x20] sm:$0xff]
    %v1621 = vld [vmem:[%s1615 + $0x28] sm:$0xff]
    %v1622 = vld [vmem:[%s1615 + $0x30] sm:$0xff]
    %v1623 = vld [vmem:[%s1615 + $0x38] sm:$0xff]
    %v1624 = vld [vmem:[%s1615 + $0x40] sm:$0xff]
    %v1625 = vld [vmem:[%s1615 + $0x48] sm:$0xff]
    %v1626 = vld [vmem:[%s1615 + $0x50] sm:$0xff]
    %v1627 = vld [vmem:[%s1615 + $0x58] sm:$0xff]
    %v1628 = vld [vmem:[%s1615 + $0x60] sm:$0xff]
    %v1629 = vld [vmem:[%s1615 + $0x68] sm:$0xff]
    %v1630 = vld [vmem:[%s1615 + $0x70] sm:$0xff]
    %v1631 = vld [vmem:[%s1615 + $0x78] sm:$0xff]
    %v1632 = vld [vmem:[%s1615 + $0x80] sm:$0xff]
    %v1633 = vld [vmem:[%s1615 + $0x88] sm:$0xff]
    %v1634 = vld [vmem:[%s1615 + $0x90] sm:$0xff]
    %v1635 = vld [vmem:[%s1615 + $0x98] sm:$0xff]
    %v1636 = vld [vmem:[%s1615 + $0xa0] sm:$0xff]
    %v1637 = vld [vmem:[%s1615 + $0xa8] sm:$0xff]
    %v1638 = vld [vmem:[%s1615 + $0xb0] sm:$0xff]
    %v1639 = vld [vmem:[%s1615 + $0xb8] sm:$0xff]
    %v1640 = vld [vmem:[%s1615 + $0xc0] sm:$0xff]
    %v1641 = vmul.f32 %v119, %v1616
    %v1642 = vmul.f32 %v120, %v1617
    %v1643 = vmul.f32 %v121, %v1618
    %v1644 = vmul.f32 %v122, %v1619
    %v1645 = vmul.f32 %v123, %v1620
    %v1646 = vmul.f32 %v124, %v1621
    %v1647 = vmul.f32 %v125, %v1622
    %v1648 = vmul.f32 %v126, %v1623
    %v1649 = vmul.f32 %v127, %v1624
    %v1650 = vmul.f32 %v128, %v1625
    %v1651 = vmul.f32 %v129, %v1626
    %v1652 = vmul.f32 %v130, %v1627
    %v1653 = vmul.f32 %v131, %v1628
    %v1654 = vmul.f32 %v132, %v1629
    %v1655 = vmul.f32 %v133, %v1630
    %v1656 = vmul.f32 %v134, %v1631
    %v1657 = vmul.f32 %v135, %v1632
    %v1658 = vmul.f32 %v136, %v1633
    %v1659 = vmul.f32 %v137, %v1634
    %v1660 = vmul.f32 %v138, %v1635
    %v1661 = vmul.f32 %v139, %v1636
    %v1662 = vmul.f32 %v140, %v1637
    %v1663 = vmul.f32 %v141, %v1638
    %v1664 = vmul.f32 %v142, %v1639
    %v1665 = vmul.f32 %v143, %v1640
    %v1666 = vadd.f32 %v1590, %v1641
    %v1667 = vadd.f32 %v1591, %v1642
    %v1668 = vadd.f32 %v1592, %v1643
    %v1669 = vadd.f32 %v1593, %v1644
    %v1670 = vadd.f32 %v1594, %v1645
    %v1671 = vadd.f32 %v1595, %v1646
    %v1672 = vadd.f32 %v1596, %v1647
    %v1673 = vadd.f32 %v1597, %v1648
    %v1674 = vadd.f32 %v1598, %v1649
    %v1675 = vadd.f32 %v1599, %v1650
    %v1676 = vadd.f32 %v1600, %v1651
    %v1677 = vadd.f32 %v1601, %v1652
    %v1678 = vadd.f32 %v1602, %v1653
    %v1679 = vadd.f32 %v1603, %v1654
    %v1680 = vadd.f32 %v1604, %v1655
    %v1681 = vadd.f32 %v1605, %v1656
    %v1682 = vadd.f32 %v1606, %v1657
    %v1683 = vadd.f32 %v1607, %v1658
    %v1684 = vadd.f32 %v1608, %v1659
    %v1685 = vadd.f32 %v1609, %v1660
    %v1686 = vadd.f32 %v1610, %v1661
    %v1687 = vadd.f32 %v1611, %v1662
    %v1688 = vadd.f32 %v1612, %v1663
    %v1689 = vadd.f32 %v1613, %v1664
    %v1690 = vadd.f32 %v1614, %v1665
    %s1691 = scalar_lea.vmem [#allocation9], 1000
    %v1692 = vld [vmem:[%s1691] sm:$0xff]
    %v1693 = vld [vmem:[%s1691 + $0x8] sm:$0xff]
    %v1694 = vld [vmem:[%s1691 + $0x10] sm:$0xff]
    %v1695 = vld [vmem:[%s1691 + $0x18] sm:$0xff]
    %v1696 = vld [vmem:[%s1691 + $0x20] sm:$0xff]
    %v1697 = vld [vmem:[%s1691 + $0x28] sm:$0xff]
    %v1698 = vld [vmem:[%s1691 + $0x30] sm:$0xff]
    %v1699 = vld [vmem:[%s1691 + $0x38] sm:$0xff]
    %v1700 = vld [vmem:[%s1691 + $0x40] sm:$0xff]
    %v1701 = vld [vmem:[%s1691 + $0x48] sm:$0xff]
    %v1702 = vld [vmem:[%s1691 + $0x50] sm:$0xff]
    %v1703 = vld [vmem:[%s1691 + $0x58] sm:$0xff]
    %v1704 = vld [vmem:[%s1691 + $0x60] sm:$0xff]
    %v1705 = vld [vmem:[%s1691 + $0x68] sm:$0xff]
    %v1706 = vld [vmem:[%s1691 + $0x70] sm:$0xff]
    %v1707 = vld [vmem:[%s1691 + $0x78] sm:$0xff]
    %v1708 = vld [vmem:[%s1691 + $0x80] sm:$0xff]
    %v1709 = vld [vmem:[%s1691 + $0x88] sm:$0xff]
    %v1710 = vld [vmem:[%s1691 + $0x90] sm:$0xff]
    %v1711 = vld [vmem:[%s1691 + $0x98] sm:$0xff]
    %v1712 = vld [vmem:[%s1691 + $0xa0] sm:$0xff]
    %v1713 = vld [vmem:[%s1691 + $0xa8] sm:$0xff]
    %v1714 = vld [vmem:[%s1691 + $0xb0] sm:$0xff]
    %v1715 = vld [vmem:[%s1691 + $0xb8] sm:$0xff]
    %v1716 = vld [vmem:[%s1691 + $0xc0] sm:$0xff]
    %v1717 = vadd.f32 %v1666, %v1692
    %v1718 = vadd.f32 %v1667, %v1693
    %v1719 = vadd.f32 %v1668, %v1694
    %v1720 = vadd.f32 %v1669, %v1695
    %v1721 = vadd.f32 %v1670, %v1696
    %v1722 = vadd.f32 %v1671, %v1697
    %v1723 = vadd.f32 %v1672, %v1698
    %v1724 = vadd.f32 %v1673, %v1699
    %v1725 = vadd.f32 %v1674, %v1700
    %v1726 = vadd.f32 %v1675, %v1701
    %v1727 = vadd.f32 %v1676, %v1702
    %v1728 = vadd.f32 %v1677, %v1703
    %v1729 = vadd.f32 %v1678, %v1704
    %v1730 = vadd.f32 %v1679, %v1705
    %v1731 = vadd.f32 %v1680, %v1706
    %v1732 = vadd.f32 %v1681, %v1707
    %v1733 = vadd.f32 %v1682, %v1708
    %v1734 = vadd.f32 %v1683, %v1709
    %v1735 = vadd.f32 %v1684, %v1710
    %v1736 = vadd.f32 %v1685, %v1711
    %v1737 = vadd.f32 %v1686, %v1712
    %v1738 = vadd.f32 %v1687, %v1713
    %v1739 = vadd.f32 %v1688, %v1714
    %v1740 = vadd.f32 %v1689, %v1715
    %v1741 = vadd.f32 %v1690, %v1716
    %v1742 = vmax.f32 %v1717, 0.0
    %v1743 = vmax.f32 %v1718, 0.0
    %v1744 = vmax.f32 %v1719, 0.0
    %v1745 = vmax.f32 %v1720, 0.0
    %v1746 = vmax.f32 %v1721, 0.0
    %v1747 = vmax.f32 %v1722, 0.0
    %v1748 = vmax.f32 %v1723, 0.0
    %v1749 = vmax.f32 %v1724, 0.0
    %v1750 = vmax.f32 %v1725, 0.0
    %v1751 = vmax.f32 %v1726, 0.0
    %v1752 = vmax.f32 %v1727, 0.0
    %v1753 = vmax.f32 %v1728, 0.0
    %v1754 = vmax.f32 %v1729, 0.0
    %v1755 = vmax.f32 %v1730, 0.0
    %v1756 = vmax.f32 %v1731, 0.0
    %v1757 = vmax.f32 %v1732, 0.0
    %v1758 = vmax.f32 %v1733, 0.0
    %v1759 = vmax.f32 %v1734, 0.0
    %v1760 = vmax.f32 %v1735, 0.0
    %v1761 = vmax.f32 %v1736, 0.0
    %v1762 = vmax.f32 %v1737, 0.0
    %v1763 = vmax.f32 %v1738, 0.0
    %v1764 = vmax.f32 %v1739, 0.0
    %v1765 = vmax.f32 %v1740, 0.0
    %v1766 = vmax.f32 %v1741, 0.0
    %s1767 = scalar_lea.vmem [#allocation11], 1000
    %v1768 = vld [vmem:[%s1767] sm:$0xff]
    %v1769 = vld [vmem:[%s1767 + $0x8] sm:$0xff]
    %v1770 = vld [vmem:[%s1767 + $0x10] sm:$0xff]
    %v1771 = vld [vmem:[%s1767 + $0x18] sm:$0xff]
    %v1772 = vld [vmem:[%s1767 + $0x20] sm:$0xff]
    %v1773 = vld [vmem:[%s1767 + $0x28] sm:$0xff]
    %v1774 = vld [vmem:[%s1767 + $0x30] sm:$0xff]
    %v1775 = vld [vmem:[%s1767 + $0x38] sm:$0xff]
    %v1776 = vld [vmem:[%s1767 + $0x40] sm:$0xff]
    %v1777 = vld [vmem:[%s1767 + $0x48] sm:$0xff]
    %v1778 = vld [vmem:[%s1767 + $0x50] sm:$0xff]
    %v1779 = vld [vmem:[%s1767 + $0x58] sm:$0xff]
    %v1780 = vld [vmem:[%s1767 + $0x60] sm:$0xff]
    %v1781 = vld [vmem:[%s1767 + $0x68] sm:$0xff]
    %v1782 = vld [vmem:[%s1767 + $0x70] sm:$0xff]
    %v1783 = vld [vmem:[%s1767 + $0x78] sm:$0xff]
    %v1784 = vld [vmem:[%s1767 + $0x80] sm:$0xff]
    %v1785 = vld [vmem:[%s1767 + $0x88] sm:$0xff]
    %v1786 = vld [vmem:[%s1767 + $0x90] sm:$0xff]
    %v1787 = vld [vmem:[%s1767 + $0x98] sm:$0xff]
    %v1788 = vld [vmem:[%s1767 + $0xa0] sm:$0xff]
    %v1789 = vld [vmem:[%s1767 + $0xa8] sm:$0xff]
    %v1790 = vld [vmem:[%s1767 + $0xb0] sm:$0xff]
    %v1791 = vld [vmem:[%s1767 + $0xb8] sm:$0xff]
    %v1792 = vld [vmem:[%s1767 + $0xc0] sm:$0xff]
    %v1793 = vmul.f32 %v1742, %v1768
    %v1794 = vmul.f32 %v1743, %v1769
    %v1795 = vmul.f32 %v1744, %v1770
    %v1796 = vmul.f32 %v1745, %v1771
    %v1797 = vmul.f32 %v1746, %v1772
    %v1798 = vmul.f32 %v1747, %v1773
    %v1799 = vmul.f32 %v1748, %v1774
    %v1800 = vmul.f32 %v1749, %v1775
    %v1801 = vmul.f32 %v1750, %v1776
    %v1802 = vmul.f32 %v1751, %v1777
    %v1803 = vmul.f32 %v1752, %v1778
    %v1804 = vmul.f32 %v1753, %v1779
    %v1805 = vmul.f32 %v1754, %v1780
    %v1806 = vmul.f32 %v1755, %v1781
    %v1807 = vmul.f32 %v1756, %v1782
    %v1808 = vmul.f32 %v1757, %v1783
    %v1809 = vmul.f32 %v1758, %v1784
    %v1810 = vmul.f32 %v1759, %v1785
    %v1811 = vmul.f32 %v1760, %v1786
    %v1812 = vmul.f32 %v1761, %v1787
    %v1813 = vmul.f32 %v1762, %v1788
    %v1814 = vmul.f32 %v1763, %v1789
    %v1815 = vmul.f32 %v1764, %v1790
    %v1816 = vmul.f32 %v1765, %v1791
    %v1817 = vmul.f32 %v1766, %v1792
    %v1818 = vadd.f32 %v1793, %v1794
    %v1819 = vadd.f32 %v1818, %v1795
    %v1820 = vadd.f32 %v1819, %v1796
    %v1821 = vadd.f32 %v1820, %v1797
    %v1822 = vadd.f32 %v1821, %v1798
    %v1823 = vadd.f32 %v1822, %v1799
    %v1824 = vadd.f32 %v1823, %v1800
    %v1825 = vadd.f32 %v1824, %v1801
    %v1826 = vadd.f32 %v1825, %v1802
    %v1827 = vadd.f32 %v1826, %v1803
    %v1828 = vadd.f32 %v1827, %v1804
    %v1829 = vadd.f32 %v1828, %v1805
    %v1830 = vadd.f32 %v1829, %v1806
    %v1831 = vadd.f32 %v1830, %v1807
    %v1832 = vadd.f32 %v1831, %v1808
    %v1833 = vadd.f32 %v1832, %v1809
    %v1834 = vadd.f32 %v1833, %v1810
    %v1835 = vadd.f32 %v1834, %v1811
    %v1836 = vadd.f32 %v1835, %v1812
    %v1837 = vadd.f32 %v1836, %v1813
    %v1838 = vadd.f32 %v1837, %v1814
    %v1839 = vadd.f32 %v1838, %v1815
    %v1840 = vadd.f32 %v1839, %v1816
    %v1841 = vadd.f32 %v1840, %v1817
    %v1842 = vrot.slane %v1841, 4
    %v1843 = vadd.f32 %v1841, %v1842
    %v1844 = vrot.slane %v1843, 2
    %v1845 = vadd.f32 %v1843, %v1844
    %v1846 = vrot.slane %v1845, 1
    %v1847 = vadd.f32 %v1845, %v1846
    %v1848 = vadd.f32 %v1563, %v1847
    %s1849 = scalar_lea.vmem [#allocation6], 1200
    %v1850 = vld [vmem:[%s1849] sm:$0xff]
    %v1851 = vld [vmem:[%s1849 + $0x8] sm:$0xff]
    %v1852 = vld [vmem:[%s1849 + $0x10] sm:$0xff]
    %v1853 = vld [vmem:[%s1849 + $0x18] sm:$0xff]
    %v1854 = vld [vmem:[%s1849 + $0x20] sm:$0xff]
    %v1855 = vld [vmem:[%s1849 + $0x28] sm:$0xff]
    %v1856 = vld [vmem:[%s1849 + $0x30] sm:$0xff]
    %v1857 = vld [vmem:[%s1849 + $0x38] sm:$0xff]
    %v1858 = vld [vmem:[%s1849 + $0x40] sm:$0xff]
    %v1859 = vld [vmem:[%s1849 + $0x48] sm:$0xff]
    %v1860 = vld [vmem:[%s1849 + $0x50] sm:$0xff]
    %v1861 = vld [vmem:[%s1849 + $0x58] sm:$0xff]
    %v1862 = vld [vmem:[%s1849 + $0x60] sm:$0xff]
    %v1863 = vld [vmem:[%s1849 + $0x68] sm:$0xff]
    %v1864 = vld [vmem:[%s1849 + $0x70] sm:$0xff]
    %v1865 = vld [vmem:[%s1849 + $0x78] sm:$0xff]
    %v1866 = vld [vmem:[%s1849 + $0x80] sm:$0xff]
    %v1867 = vld [vmem:[%s1849 + $0x88] sm:$0xff]
    %v1868 = vld [vmem:[%s1849 + $0x90] sm:$0xff]
    %v1869 = vld [vmem:[%s1849 + $0x98] sm:$0xff]
    %v1870 = vld [vmem:[%s1849 + $0xa0] sm:$0xff]
    %v1871 = vld [vmem:[%s1849 + $0xa8] sm:$0xff]
    %v1872 = vld [vmem:[%s1849 + $0xb0] sm:$0xff]
    %v1873 = vld [vmem:[%s1849 + $0xb8] sm:$0xff]
    %v1874 = vld [vmem:[%s1849 + $0xc0] sm:$0xff]
    %v1875 = vmul.f32 %v94, %v1850
    %v1876 = vmul.f32 %v95, %v1851
    %v1877 = vmul.f32 %v96, %v1852
    %v1878 = vmul.f32 %v97, %v1853
    %v1879 = vmul.f32 %v98, %v1854
    %v1880 = vmul.f32 %v99, %v1855
    %v1881 = vmul.f32 %v100, %v1856
    %v1882 = vmul.f32 %v101, %v1857
    %v1883 = vmul.f32 %v102, %v1858
    %v1884 = vmul.f32 %v103, %v1859
    %v1885 = vmul.f32 %v104, %v1860
    %v1886 = vmul.f32 %v105, %v1861
    %v1887 = vmul.f32 %v106, %v1862
    %v1888 = vmul.f32 %v107, %v1863
    %v1889 = vmul.f32 %v108, %v1864
    %v1890 = vmul.f32 %v109, %v1865
    %v1891 = vmul.f32 %v110, %v1866
    %v1892 = vmul.f32 %v111, %v1867
    %v1893 = vmul.f32 %v112, %v1868
    %v1894 = vmul.f32 %v113, %v1869
    %v1895 = vmul.f32 %v114, %v1870
    %v1896 = vmul.f32 %v115, %v1871
    %v1897 = vmul.f32 %v116, %v1872
    %v1898 = vmul.f32 %v117, %v1873
    %v1899 = vmul.f32 %v118, %v1874
    %s1900 = scalar_lea.vmem [#allocation8], 1200
    %v1901 = vld [vmem:[%s1900] sm:$0xff]
    %v1902 = vld [vmem:[%s1900 + $0x8] sm:$0xff]
    %v1903 = vld [vmem:[%s1900 + $0x10] sm:$0xff]
    %v1904 = vld [vmem:[%s1900 + $0x18] sm:$0xff]
    %v1905 = vld [vmem:[%s1900 + $0x20] sm:$0xff]
    %v1906 = vld [vmem:[%s1900 + $0x28] sm:$0xff]
    %v1907 = vld [vmem:[%s1900 + $0x30] sm:$0xff]
    %v1908 = vld [vmem:[%s1900 + $0x38] sm:$0xff]
    %v1909 = vld [vmem:[%s1900 + $0x40] sm:$0xff]
    %v1910 = vld [vmem:[%s1900 + $0x48] sm:$0xff]
    %v1911 = vld [vmem:[%s1900 + $0x50] sm:$0xff]
    %v1912 = vld [vmem:[%s1900 + $0x58] sm:$0xff]
    %v1913 = vld [vmem:[%s1900 + $0x60] sm:$0xff]
    %v1914 = vld [vmem:[%s1900 + $0x68] sm:$0xff]
    %v1915 = vld [vmem:[%s1900 + $0x70] sm:$0xff]
    %v1916 = vld [vmem:[%s1900 + $0x78] sm:$0xff]
    %v1917 = vld [vmem:[%s1900 + $0x80] sm:$0xff]
    %v1918 = vld [vmem:[%s1900 + $0x88] sm:$0xff]
    %v1919 = vld [vmem:[%s1900 + $0x90] sm:$0xff]
    %v1920 = vld [vmem:[%s1900 + $0x98] sm:$0xff]
    %v1921 = vld [vmem:[%s1900 + $0xa0] sm:$0xff]
    %v1922 = vld [vmem:[%s1900 + $0xa8] sm:$0xff]
    %v1923 = vld [vmem:[%s1900 + $0xb0] sm:$0xff]
    %v1924 = vld [vmem:[%s1900 + $0xb8] sm:$0xff]
    %v1925 = vld [vmem:[%s1900 + $0xc0] sm:$0xff]
    %v1926 = vmul.f32 %v119, %v1901
    %v1927 = vmul.f32 %v120, %v1902
    %v1928 = vmul.f32 %v121, %v1903
    %v1929 = vmul.f32 %v122, %v1904
    %v1930 = vmul.f32 %v123, %v1905
    %v1931 = vmul.f32 %v124, %v1906
    %v1932 = vmul.f32 %v125, %v1907
    %v1933 = vmul.f32 %v126, %v1908
    %v1934 = vmul.f32 %v127, %v1909
    %v1935 = vmul.f32 %v128, %v1910
    %v1936 = vmul.f32 %v129, %v1911
    %v1937 = vmul.f32 %v130, %v1912
    %v1938 = vmul.f32 %v131, %v1913
    %v1939 = vmul.f32 %v132, %v1914
    %v1940 = vmul.f32 %v133, %v1915
    %v1941 = vmul.f32 %v134, %v1916
    %v1942 = vmul.f32 %v135, %v1917
    %v1943 = vmul.f32 %v136, %v1918
    %v1944 = vmul.f32 %v137, %v1919
    %v1945 = vmul.f32 %v138, %v1920
    %v1946 = vmul.f32 %v139, %v1921
    %v1947 = vmul.f32 %v140, %v1922
    %v1948 = vmul.f32 %v141, %v1923
    %v1949 = vmul.f32 %v142, %v1924
    %v1950 = vmul.f32 %v143, %v1925
    %v1951 = vadd.f32 %v1875, %v1926
    %v1952 = vadd.f32 %v1876, %v1927
    %v1953 = vadd.f32 %v1877, %v1928
    %v1954 = vadd.f32 %v1878, %v1929
    %v1955 = vadd.f32 %v1879, %v1930
    %v1956 = vadd.f32 %v1880, %v1931
    %v1957 = vadd.f32 %v1881, %v1932
    %v1958 = vadd.f32 %v1882, %v1933
    %v1959 = vadd.f32 %v1883, %v1934
    %v1960 = vadd.f32 %v1884, %v1935
    %v1961 = vadd.f32 %v1885, %v1936
    %v1962 = vadd.f32 %v1886, %v1937
    %v1963 = vadd.f32 %v1887, %v1938
    %v1964 = vadd.f32 %v1888, %v1939
    %v1965 = vadd.f32 %v1889, %v1940
    %v1966 = vadd.f32 %v1890, %v1941
    %v1967 = vadd.f32 %v1891, %v1942
    %v1968 = vadd.f32 %v1892, %v1943
    %v1969 = vadd.f32 %v1893, %v1944
    %v1970 = vadd.f32 %v1894, %v1945
    %v1971 = vadd.f32 %v1895, %v1946
    %v1972 = vadd.f32 %v1896, %v1947
    %v1973 = vadd.f32 %v1897, %v1948
    %v1974 = vadd.f32 %v1898, %v1949
    %v1975 = vadd.f32 %v1899, %v1950
    %s1976 = scalar_lea.vmem [#allocation9], 1200
    %v1977 = vld [vmem:[%s1976] sm:$0xff]
    %v1978 = vld [vmem:[%s1976 + $0x8] sm:$0xff]
    %v1979 = vld [vmem:[%s1976 + $0x10] sm:$0xff]
    %v1980 = vld [vmem:[%s1976 + $0x18] sm:$0xff]
    %v1981 = vld [vmem:[%s1976 + $0x20] sm:$0xff]
    %v1982 = vld [vmem:[%s1976 + $0x28] sm:$0xff]
    %v1983 = vld [vmem:[%s1976 + $0x30] sm:$0xff]
    %v1984 = vld [vmem:[%s1976 + $0x38] sm:$0xff]
    %v1985 = vld [vmem:[%s1976 + $0x40] sm:$0xff]
    %v1986 = vld [vmem:[%s1976 + $0x48] sm:$0xff]
    %v1987 = vld [vmem:[%s1976 + $0x50] sm:$0xff]
    %v1988 = vld [vmem:[%s1976 + $0x58] sm:$0xff]
    %v1989 = vld [vmem:[%s1976 + $0x60] sm:$0xff]
    %v1990 = vld [vmem:[%s1976 + $0x68] sm:$0xff]
    %v1991 = vld [vmem:[%s1976 + $0x70] sm:$0xff]
    %v1992 = vld [vmem:[%s1976 + $0x78] sm:$0xff]
    %v1993 = vld [vmem:[%s1976 + $0x80] sm:$0xff]
    %v1994 = vld [vmem:[%s1976 + $0x88] sm:$0xff]
    %v1995 = vld [vmem:[%s1976 + $0x90] sm:$0xff]
    %v1996 = vld [vmem:[%s1976 + $0x98] sm:$0xff]
    %v1997 = vld [vmem:[%s1976 + $0xa0] sm:$0xff]
    %v1998 = vld [vmem:[%s1976 + $0xa8] sm:$0xff]
    %v1999 = vld [vmem:[%s1976 + $0xb0] sm:$0xff]
    %v2000 = vld [vmem:[%s1976 + $0xb8] sm:$0xff]
    %v2001 = vld [vmem:[%s1976 + $0xc0] sm:$0xff]
    %v2002 = vadd.f32 %v1951, %v1977
    %v2003 = vadd.f32 %v1952, %v1978
    %v2004 = vadd.f32 %v1953, %v1979
    %v2005 = vadd.f32 %v1954, %v1980
    %v2006 = vadd.f32 %v1955, %v1981
    %v2007 = vadd.f32 %v1956, %v1982
    %v2008 = vadd.f32 %v1957, %v1983
    %v2009 = vadd.f32 %v1958, %v1984
    %v2010 = vadd.f32 %v1959, %v1985
    %v2011 = vadd.f32 %v1960, %v1986
    %v2012 = vadd.f32 %v1961, %v1987
    %v2013 = vadd.f32 %v1962, %v1988
    %v2014 = vadd.f32 %v1963, %v1989
    %v2015 = vadd.f32 %v1964, %v1990
    %v2016 = vadd.f32 %v1965, %v1991
    %v2017 = vadd.f32 %v1966, %v1992
    %v2018 = vadd.f32 %v1967, %v1993
    %v2019 = vadd.f32 %v1968, %v1994
    %v2020 = vadd.f32 %v1969, %v1995
    %v2021 = vadd.f32 %v1970, %v1996
    %v2022 = vadd.f32 %v1971, %v1997
    %v2023 = vadd.f32 %v1972, %v1998
    %v2024 = vadd.f32 %v1973, %v1999
    %v2025 = vadd.f32 %v1974, %v2000
    %v2026 = vadd.f32 %v1975, %v2001
    %v2027 = vmax.f32 %v2002, 0.0
    %v2028 = vmax.f32 %v2003, 0.0
    %v2029 = vmax.f32 %v2004, 0.0
    %v2030 = vmax.f32 %v2005, 0.0
    %v2031 = vmax.f32 %v2006, 0.0
    %v2032 = vmax.f32 %v2007, 0.0
    %v2033 = vmax.f32 %v2008, 0.0
    %v2034 = vmax.f32 %v2009, 0.0
    %v2035 = vmax.f32 %v2010, 0.0
    %v2036 = vmax.f32 %v2011, 0.0
    %v2037 = vmax.f32 %v2012, 0.0
    %v2038 = vmax.f32 %v2013, 0.0
    %v2039 = vmax.f32 %v2014, 0.0
    %v2040 = vmax.f32 %v2015, 0.0
    %v2041 = vmax.f32 %v2016, 0.0
    %v2042 = vmax.f32 %v2017, 0.0
    %v2043 = vmax.f32 %v2018, 0.0
    %v2044 = vmax.f32 %v2019, 0.0
    %v2045 = vmax.f32 %v2020, 0.0
    %v2046 = vmax.f32 %v2021, 0.0
    %v2047 = vmax.f32 %v2022, 0.0
    %v2048 = vmax.f32 %v2023, 0.0
    %v2049 = vmax.f32 %v2024, 0.0
    %v2050 = vmax.f32 %v2025, 0.0
    %v2051 = vmax.f32 %v2026, 0.0
    %s2052 = scalar_lea.vmem [#allocation11], 1200
    %v2053 = vld [vmem:[%s2052] sm:$0xff]
    %v2054 = vld [vmem:[%s2052 + $0x8] sm:$0xff]
    %v2055 = vld [vmem:[%s2052 + $0x10] sm:$0xff]
    %v2056 = vld [vmem:[%s2052 + $0x18] sm:$0xff]
    %v2057 = vld [vmem:[%s2052 + $0x20] sm:$0xff]
    %v2058 = vld [vmem:[%s2052 + $0x28] sm:$0xff]
    %v2059 = vld [vmem:[%s2052 + $0x30] sm:$0xff]
    %v2060 = vld [vmem:[%s2052 + $0x38] sm:$0xff]
    %v2061 = vld [vmem:[%s2052 + $0x40] sm:$0xff]
    %v2062 = vld [vmem:[%s2052 + $0x48] sm:$0xff]
    %v2063 = vld [vmem:[%s2052 + $0x50] sm:$0xff]
    %v2064 = vld [vmem:[%s2052 + $0x58] sm:$0xff]
    %v2065 = vld [vmem:[%s2052 + $0x60] sm:$0xff]
    %v2066 = vld [vmem:[%s2052 + $0x68] sm:$0xff]
    %v2067 = vld [vmem:[%s2052 + $0x70] sm:$0xff]
    %v2068 = vld [vmem:[%s2052 + $0x78] sm:$0xff]
    %v2069 = vld [vmem:[%s2052 + $0x80] sm:$0xff]
    %v2070 = vld [vmem:[%s2052 + $0x88] sm:$0xff]
    %v2071 = vld [vmem:[%s2052 + $0x90] sm:$0xff]
    %v2072 = vld [vmem:[%s2052 + $0x98] sm:$0xff]
    %v2073 = vld [vmem:[%s2052 + $0xa0] sm:$0xff]
    %v2074 = vld [vmem:[%s2052 + $0xa8] sm:$0xff]
    %v2075 = vld [vmem:[%s2052 + $0xb0] sm:$0xff]
    %v2076 = vld [vmem:[%s2052 + $0xb8] sm:$0xff]
    %v2077 = vld [vmem:[%s2052 + $0xc0] sm:$0xff]
    %v2078 = vmul.f32 %v2027, %v2053
    %v2079 = vmul.f32 %v2028, %v2054
    %v2080 = vmul.f32 %v2029, %v2055
    %v2081 = vmul.f32 %v2030, %v2056
    %v2082 = vmul.f32 %v2031, %v2057
    %v2083 = vmul.f32 %v2032, %v2058
    %v2084 = vmul.f32 %v2033, %v2059
    %v2085 = vmul.f32 %v2034, %v2060
    %v2086 = vmul.f32 %v2035, %v2061
    %v2087 = vmul.f32 %v2036, %v2062
    %v2088 = vmul.f32 %v2037, %v2063
    %v2089 = vmul.f32 %v2038, %v2064
    %v2090 = vmul.f32 %v2039, %v2065
    %v2091 = vmul.f32 %v2040, %v2066
    %v2092 = vmul.f32 %v2041, %v2067
    %v2093 = vmul.f32 %v2042, %v2068
    %v2094 = vmul.f32 %v2043, %v2069
    %v2095 = vmul.f32 %v2044, %v2070
    %v2096 = vmul.f32 %v2045, %v2071
    %v2097 = vmul.f32 %v2046, %v2072
    %v2098 = vmul.f32 %v2047, %v2073
    %v2099 = vmul.f32 %v2048, %v2074
    %v2100 = vmul.f32 %v2049, %v2075
    %v2101 = vmul.f32 %v2050, %v2076
    %v2102 = vmul.f32 %v2051, %v2077
    %v2103 = vadd.f32 %v2078, %v2079
    %v2104 = vadd.f32 %v2103, %v2080
    %v2105 = vadd.f32 %v2104, %v2081
    %v2106 = vadd.f32 %v2105, %v2082
    %v2107 = vadd.f32 %v2106, %v2083
    %v2108 = vadd.f32 %v2107, %v2084
    %v2109 = vadd.f32 %v2108, %v2085
    %v2110 = vadd.f32 %v2109, %v2086
    %v2111 = vadd.f32 %v2110, %v2087
    %v2112 = vadd.f32 %v2111, %v2088
    %v2113 = vadd.f32 %v2112, %v2089
    %v2114 = vadd.f32 %v2113, %v2090
    %v2115 = vadd.f32 %v2114, %v2091
    %v2116 = vadd.f32 %v2115, %v2092
    %v2117 = vadd.f32 %v2116, %v2093
    %v2118 = vadd.f32 %v2117, %v2094
    %v2119 = vadd.f32 %v2118, %v2095
    %v2120 = vadd.f32 %v2119, %v2096
    %v2121 = vadd.f32 %v2120, %v2097
    %v2122 = vadd.f32 %v2121, %v2098
    %v2123 = vadd.f32 %v2122, %v2099
    %v2124 = vadd.f32 %v2123, %v2100
    %v2125 = vadd.f32 %v2124, %v2101
    %v2126 = vadd.f32 %v2125, %v2102
    %v2127 = vrot.slane %v2126, 4
    %v2128 = vadd.f32 %v2126, %v2127
    %v2129 = vrot.slane %v2128, 2
    %v2130 = vadd.f32 %v2128, %v2129
    %v2131 = vrot.slane %v2130, 1
    %v2132 = vadd.f32 %v2130, %v2131
    %v2133 = vadd.f32 %v1848, %v2132
    %s2134 = scalar_lea.vmem [#allocation6], 1400
    %v2135 = vld [vmem:[%s2134] sm:$0xff]
    %v2136 = vld [vmem:[%s2134 + $0x8] sm:$0xff]
    %v2137 = vld [vmem:[%s2134 + $0x10] sm:$0xff]
    %v2138 = vld [vmem:[%s2134 + $0x18] sm:$0xff]
    %v2139 = vld [vmem:[%s2134 + $0x20] sm:$0xff]
    %v2140 = vld [vmem:[%s2134 + $0x28] sm:$0xff]
    %v2141 = vld [vmem:[%s2134 + $0x30] sm:$0xff]
    %v2142 = vld [vmem:[%s2134 + $0x38] sm:$0xff]
    %v2143 = vld [vmem:[%s2134 + $0x40] sm:$0xff]
    %v2144 = vld [vmem:[%s2134 + $0x48] sm:$0xff]
    %v2145 = vld [vmem:[%s2134 + $0x50] sm:$0xff]
    %v2146 = vld [vmem:[%s2134 + $0x58] sm:$0xff]
    %v2147 = vld [vmem:[%s2134 + $0x60] sm:$0xff]
    %v2148 = vld [vmem:[%s2134 + $0x68] sm:$0xff]
    %v2149 = vld [vmem:[%s2134 + $0x70] sm:$0xff]
    %v2150 = vld [vmem:[%s2134 + $0x78] sm:$0xff]
    %v2151 = vld [vmem:[%s2134 + $0x80] sm:$0xff]
    %v2152 = vld [vmem:[%s2134 + $0x88] sm:$0xff]
    %v2153 = vld [vmem:[%s2134 + $0x90] sm:$0xff]
    %v2154 = vld [vmem:[%s2134 + $0x98] sm:$0xff]
    %v2155 = vld [vmem:[%s2134 + $0xa0] sm:$0xff]
    %v2156 = vld [vmem:[%s2134 + $0xa8] sm:$0xff]
    %v2157 = vld [vmem:[%s2134 + $0xb0] sm:$0xff]
    %v2158 = vld [vmem:[%s2134 + $0xb8] sm:$0xff]
    %v2159 = vld [vmem:[%s2134 + $0xc0] sm:$0xff]
    %v2160 = vmul.f32 %v94, %v2135
    %v2161 = vmul.f32 %v95, %v2136
    %v2162 = vmul.f32 %v96, %v2137
    %v2163 = vmul.f32 %v97, %v2138
    %v2164 = vmul.f32 %v98, %v2139
    %v2165 = vmul.f32 %v99, %v2140
    %v2166 = vmul.f32 %v100, %v2141
    %v2167 = vmul.f32 %v101, %v2142
    %v2168 = vmul.f32 %v102, %v2143
    %v2169 = vmul.f32 %v103, %v2144
    %v2170 = vmul.f32 %v104, %v2145
    %v2171 = vmul.f32 %v105, %v2146
    %v2172 = vmul.f32 %v106, %v2147
    %v2173 = vmul.f32 %v107, %v2148
    %v2174 = vmul.f32 %v108, %v2149
    %v2175 = vmul.f32 %v109, %v2150
    %v2176 = vmul.f32 %v110, %v2151
    %v2177 = vmul.f32 %v111, %v2152
    %v2178 = vmul.f32 %v112, %v2153
    %v2179 = vmul.f32 %v113, %v2154
    %v2180 = vmul.f32 %v114, %v2155
    %v2181 = vmul.f32 %v115, %v2156
    %v2182 = vmul.f32 %v116, %v2157
    %v2183 = vmul.f32 %v117, %v2158
    %v2184 = vmul.f32 %v118, %v2159
    %s2185 = scalar_lea.vmem [#allocation8], 1400
    %v2186 = vld [vmem:[%s2185] sm:$0xff]
    %v2187 = vld [vmem:[%s2185 + $0x8] sm:$0xff]
    %v2188 = vld [vmem:[%s2185 + $0x10] sm:$0xff]
    %v2189 = vld [vmem:[%s2185 + $0x18] sm:$0xff]
    %v2190 = vld [vmem:[%s2185 + $0x20] sm:$0xff]
    %v2191 = vld [vmem:[%s2185 + $0x28] sm:$0xff]
    %v2192 = vld [vmem:[%s2185 + $0x30] sm:$0xff]
    %v2193 = vld [vmem:[%s2185 + $0x38] sm:$0xff]
    %v2194 = vld [vmem:[%s2185 + $0x40] sm:$0xff]
    %v2195 = vld [vmem:[%s2185 + $0x48] sm:$0xff]
    %v2196 = vld [vmem:[%s2185 + $0x50] sm:$0xff]
    %v2197 = vld [vmem:[%s2185 + $0x58] sm:$0xff]
    %v2198 = vld [vmem:[%s2185 + $0x60] sm:$0xff]
    %v2199 = vld [vmem:[%s2185 + $0x68] sm:$0xff]
    %v2200 = vld [vmem:[%s2185 + $0x70] sm:$0xff]
    %v2201 = vld [vmem:[%s2185 + $0x78] sm:$0xff]
    %v2202 = vld [vmem:[%s2185 + $0x80] sm:$0xff]
    %v2203 = vld [vmem:[%s2185 + $0x88] sm:$0xff]
    %v2204 = vld [vmem:[%s2185 + $0x90] sm:$0xff]
    %v2205 = vld [vmem:[%s2185 + $0x98] sm:$0xff]
    %v2206 = vld [vmem:[%s2185 + $0xa0] sm:$0xff]
    %v2207 = vld [vmem:[%s2185 + $0xa8] sm:$0xff]
    %v2208 = vld [vmem:[%s2185 + $0xb0] sm:$0xff]
    %v2209 = vld [vmem:[%s2185 + $0xb8] sm:$0xff]
    %v2210 = vld [vmem:[%s2185 + $0xc0] sm:$0xff]
    %v2211 = vmul.f32 %v119, %v2186
    %v2212 = vmul.f32 %v120, %v2187
    %v2213 = vmul.f32 %v121, %v2188
    %v2214 = vmul.f32 %v122, %v2189
    %v2215 = vmul.f32 %v123, %v2190
    %v2216 = vmul.f32 %v124, %v2191
    %v2217 = vmul.f32 %v125, %v2192
    %v2218 = vmul.f32 %v126, %v2193
    %v2219 = vmul.f32 %v127, %v2194
    %v2220 = vmul.f32 %v128, %v2195
    %v2221 = vmul.f32 %v129, %v2196
    %v2222 = vmul.f32 %v130, %v2197
    %v2223 = vmul.f32 %v131, %v2198
    %v2224 = vmul.f32 %v132, %v2199
    %v2225 = vmul.f32 %v133, %v2200
    %v2226 = vmul.f32 %v134, %v2201
    %v2227 = vmul.f32 %v135, %v2202
    %v2228 = vmul.f32 %v136, %v2203
    %v2229 = vmul.f32 %v137, %v2204
    %v2230 = vmul.f32 %v138, %v2205
    %v2231 = vmul.f32 %v139, %v2206
    %v2232 = vmul.f32 %v140, %v2207
    %v2233 = vmul.f32 %v141, %v2208
    %v2234 = vmul.f32 %v142, %v2209
    %v2235 = vmul.f32 %v143, %v2210
    %v2236 = vadd.f32 %v2160, %v2211
    %v2237 = vadd.f32 %v2161, %v2212
    %v2238 = vadd.f32 %v2162, %v2213
    %v2239 = vadd.f32 %v2163, %v2214
    %v2240 = vadd.f32 %v2164, %v2215
    %v2241 = vadd.f32 %v2165, %v2216
    %v2242 = vadd.f32 %v2166, %v2217
    %v2243 = vadd.f32 %v2167, %v2218
    %v2244 = vadd.f32 %v2168, %v2219
    %v2245 = vadd.f32 %v2169, %v2220
    %v2246 = vadd.f32 %v2170, %v2221
    %v2247 = vadd.f32 %v2171, %v2222
    %v2248 = vadd.f32 %v2172, %v2223
    %v2249 = vadd.f32 %v2173, %v2224
    %v2250 = vadd.f32 %v2174, %v2225
    %v2251 = vadd.f32 %v2175, %v2226
    %v2252 = vadd.f32 %v2176, %v2227
    %v2253 = vadd.f32 %v2177, %v2228
    %v2254 = vadd.f32 %v2178, %v2229
    %v2255 = vadd.f32 %v2179, %v2230
    %v2256 = vadd.f32 %v2180, %v2231
    %v2257 = vadd.f32 %v2181, %v2232
    %v2258 = vadd.f32 %v2182, %v2233
    %v2259 = vadd.f32 %v2183, %v2234
    %v2260 = vadd.f32 %v2184, %v2235
    %s2261 = scalar_lea.vmem [#allocation9], 1400
    %v2262 = vld [vmem:[%s2261] sm:$0xff]
    %v2263 = vld [vmem:[%s2261 + $0x8] sm:$0xff]
    %v2264 = vld [vmem:[%s2261 + $0x10] sm:$0xff]
    %v2265 = vld [vmem:[%s2261 + $0x18] sm:$0xff]
    %v2266 = vld [vmem:[%s2261 + $0x20] sm:$0xff]
    %v2267 = vld [vmem:[%s2261 + $0x28] sm:$0xff]
    %v2268 = vld [vmem:[%s2261 + $0x30] sm:$0xff]
    %v2269 = vld [vmem:[%s2261 + $0x38] sm:$0xff]
    %v2270 = vld [vmem:[%s2261 + $0x40] sm:$0xff]
    %v2271 = vld [vmem:[%s2261 + $0x48] sm:$0xff]
    %v2272 = vld [vmem:[%s2261 + $0x50] sm:$0xff]
    %v2273 = vld [vmem:[%s2261 + $0x58] sm:$0xff]
    %v2274 = vld [vmem:[%s2261 + $0x60] sm:$0xff]
    %v2275 = vld [vmem:[%s2261 + $0x68] sm:$0xff]
    %v2276 = vld [vmem:[%s2261 + $0x70] sm:$0xff]
    %v2277 = vld [vmem:[%s2261 + $0x78] sm:$0xff]
    %v2278 = vld [vmem:[%s2261 + $0x80] sm:$0xff]
    %v2279 = vld [vmem:[%s2261 + $0x88] sm:$0xff]
    %v2280 = vld [vmem:[%s2261 + $0x90] sm:$0xff]
    %v2281 = vld [vmem:[%s2261 + $0x98] sm:$0xff]
    %v2282 = vld [vmem:[%s2261 + $0xa0] sm:$0xff]
    %v2283 = vld [vmem:[%s2261 + $0xa8] sm:$0xff]
    %v2284 = vld [vmem:[%s2261 + $0xb0] sm:$0xff]
    %v2285 = vld [vmem:[%s2261 + $0xb8] sm:$0xff]
    %v2286 = vld [vmem:[%s2261 + $0xc0] sm:$0xff]
    %v2287 = vadd.f32 %v2236, %v2262
    %v2288 = vadd.f32 %v2237, %v2263
    %v2289 = vadd.f32 %v2238, %v2264
    %v2290 = vadd.f32 %v2239, %v2265
    %v2291 = vadd.f32 %v2240, %v2266
    %v2292 = vadd.f32 %v2241, %v2267
    %v2293 = vadd.f32 %v2242, %v2268
    %v2294 = vadd.f32 %v2243, %v2269
    %v2295 = vadd.f32 %v2244, %v2270
    %v2296 = vadd.f32 %v2245, %v2271
    %v2297 = vadd.f32 %v2246, %v2272
    %v2298 = vadd.f32 %v2247, %v2273
    %v2299 = vadd.f32 %v2248, %v2274
    %v2300 = vadd.f32 %v2249, %v2275
    %v2301 = vadd.f32 %v2250, %v2276
    %v2302 = vadd.f32 %v2251, %v2277
    %v2303 = vadd.f32 %v2252, %v2278
    %v2304 = vadd.f32 %v2253, %v2279
    %v2305 = vadd.f32 %v2254, %v2280
    %v2306 = vadd.f32 %v2255, %v2281
    %v2307 = vadd.f32 %v2256, %v2282
    %v2308 = vadd.f32 %v2257, %v2283
    %v2309 = vadd.f32 %v2258, %v2284
    %v2310 = vadd.f32 %v2259, %v2285
    %v2311 = vadd.f32 %v2260, %v2286
    %v2312 = vmax.f32 %v2287, 0.0
    %v2313 = vmax.f32 %v2288, 0.0
    %v2314 = vmax.f32 %v2289, 0.0
    %v2315 = vmax.f32 %v2290, 0.0
    %v2316 = vmax.f32 %v2291, 0.0
    %v2317 = vmax.f32 %v2292, 0.0
    %v2318 = vmax.f32 %v2293, 0.0
    %v2319 = vmax.f32 %v2294, 0.0
    %v2320 = vmax.f32 %v2295, 0.0
    %v2321 = vmax.f32 %v2296, 0.0
    %v2322 = vmax.f32 %v2297, 0.0
    %v2323 = vmax.f32 %v2298, 0.0
    %v2324 = vmax.f32 %v2299, 0.0
    %v2325 = vmax.f32 %v2300, 0.0
    %v2326 = vmax.f32 %v2301, 0.0
    %v2327 = vmax.f32 %v2302, 0.0
    %v2328 = vmax.f32 %v2303, 0.0
    %v2329 = vmax.f32 %v2304, 0.0
    %v2330 = vmax.f32 %v2305, 0.0
    %v2331 = vmax.f32 %v2306, 0.0
    %v2332 = vmax.f32 %v2307, 0.0
    %v2333 = vmax.f32 %v2308, 0.0
    %v2334 = vmax.f32 %v2309, 0.0
    %v2335 = vmax.f32 %v2310, 0.0
    %v2336 = vmax.f32 %v2311, 0.0
    %s2337 = scalar_lea.vmem [#allocation11], 1400
    %v2338 = vld [vmem:[%s2337] sm:$0xff]
    %v2339 = vld [vmem:[%s2337 + $0x8] sm:$0xff]
    %v2340 = vld [vmem:[%s2337 + $0x10] sm:$0xff]
    %v2341 = vld [vmem:[%s2337 + $0x18] sm:$0xff]
    %v2342 = vld [vmem:[%s2337 + $0x20] sm:$0xff]
    %v2343 = vld [vmem:[%s2337 + $0x28] sm:$0xff]
    %v2344 = vld [vmem:[%s2337 + $0x30] sm:$0xff]
    %v2345 = vld [vmem:[%s2337 + $0x38] sm:$0xff]
    %v2346 = vld [vmem:[%s2337 + $0x40] sm:$0xff]
    %v2347 = vld [vmem:[%s2337 + $0x48] sm:$0xff]
    %v2348 = vld [vmem:[%s2337 + $0x50] sm:$0xff]
    %v2349 = vld [vmem:[%s2337 + $0x58] sm:$0xff]
    %v2350 = vld [vmem:[%s2337 + $0x60] sm:$0xff]
    %v2351 = vld [vmem:[%s2337 + $0x68] sm:$0xff]
    %v2352 = vld [vmem:[%s2337 + $0x70] sm:$0xff]
    %v2353 = vld [vmem:[%s2337 + $0x78] sm:$0xff]
    %v2354 = vld [vmem:[%s2337 + $0x80] sm:$0xff]
    %v2355 = vld [vmem:[%s2337 + $0x88] sm:$0xff]
    %v2356 = vld [vmem:[%s2337 + $0x90] sm:$0xff]
    %v2357 = vld [vmem:[%s2337 + $0x98] sm:$0xff]
    %v2358 = vld [vmem:[%s2337 + $0xa0] sm:$0xff]
    %v2359 = vld [vmem:[%s2337 + $0xa8] sm:$0xff]
    %v2360 = vld [vmem:[%s2337 + $0xb0] sm:$0xff]
    %v2361 = vld [vmem:[%s2337 + $0xb8] sm:$0xff]
    %v2362 = vld [vmem:[%s2337 + $0xc0] sm:$0xff]
    %v2363 = vmul.f32 %v2312, %v2338
    %v2364 = vmul.f32 %v2313, %v2339
    %v2365 = vmul.f32 %v2314, %v2340
    %v2366 = vmul.f32 %v2315, %v2341
    %v2367 = vmul.f32 %v2316, %v2342
    %v2368 = vmul.f32 %v2317, %v2343
    %v2369 = vmul.f32 %v2318, %v2344
    %v2370 = vmul.f32 %v2319, %v2345
    %v2371 = vmul.f32 %v2320, %v2346
    %v2372 = vmul.f32 %v2321, %v2347
    %v2373 = vmul.f32 %v2322, %v2348
    %v2374 = vmul.f32 %v2323, %v2349
    %v2375 = vmul.f32 %v2324, %v2350
    %v2376 = vmul.f32 %v2325, %v2351
    %v2377 = vmul.f32 %v2326, %v2352
    %v2378 = vmul.f32 %v2327, %v2353
    %v2379 = vmul.f32 %v2328, %v2354
    %v2380 = vmul.f32 %v2329, %v2355
    %v2381 = vmul.f32 %v2330, %v2356
    %v2382 = vmul.f32 %v2331, %v2357
    %v2383 = vmul.f32 %v2332, %v2358
    %v2384 = vmul.f32 %v2333, %v2359
    %v2385 = vmul.f32 %v2334, %v2360
    %v2386 = vmul.f32 %v2335, %v2361
    %v2387 = vmul.f32 %v2336, %v2362
    %v2388 = vadd.f32 %v2363, %v2364
    %v2389 = vadd.f32 %v2388, %v2365
    %v2390 = vadd.f32 %v2389, %v2366
    %v2391 = vadd.f32 %v2390, %v2367
    %v2392 = vadd.f32 %v2391, %v2368
    %v2393 = vadd.f32 %v2392, %v2369
    %v2394 = vadd.f32 %v2393, %v2370
    %v2395 = vadd.f32 %v2394, %v2371
    %v2396 = vadd.f32 %v2395, %v2372
    %v2397 = vadd.f32 %v2396, %v2373
    %v2398 = vadd.f32 %v2397, %v2374
    %v2399 = vadd.f32 %v2398, %v2375
    %v2400 = vadd.f32 %v2399, %v2376
    %v2401 = vadd.f32 %v2400, %v2377
    %v2402 = vadd.f32 %v2401, %v2378
    %v2403 = vadd.f32 %v2402, %v2379
    %v2404 = vadd.f32 %v2403, %v2380
    %v2405 = vadd.f32 %v2404, %v2381
    %v2406 = vadd.f32 %v2405, %v2382
    %v2407 = vadd.f32 %v2406, %v2383
    %v2408 = vadd.f32 %v2407, %v2384
    %v2409 = vadd.f32 %v2408, %v2385
    %v2410 = vadd.f32 %v2409, %v2386
    %v2411 = vadd.f32 %v2410, %v2387
    %v2412 = vrot.slane %v2411, 4
    %v2413 = vadd.f32 %v2411, %v2412
    %v2414 = vrot.slane %v2413, 2
    %v2415 = vadd.f32 %v2413, %v2414
    %v2416 = vrot.slane %v2415, 1
    %v2417 = vadd.f32 %v2415, %v2416
    %v2418 = vadd.f32 %v2133, %v2417
    %v2419 = vstv %s93
    %v2420 = vadd.f32 %v2418, %v2419
    %v2421 = vxor.u32 %v2420, 2147483648
    %v2422 = vmul.f32 %v2421, 1.442695
    %v2423 = vpow.pop %v2422
    %v2424 = vadd.f32 %v2423, 1.0
    %v2425 = vrcp.pop %v2424
    %v2426 = vmul.f32 1.0, %v2425
    %2427 = vst [vmem:[#allocation12] sm:$0x1] %v2426
    // Predicated region
    $region46: #{tpu_custom_call.1} parent=1 // pred_check
      _
    $region47: #{tpu_custom_call.1} parent=1 // pred_check_branch
      %2429 = sbr.rel (0) target = $region49
    $region48: #{tpu_custom_call.1} parent=1 // pred_region
      %s2431 = ssub.s32 16, 16
      %2432 = vsyncadd [#allocation5], %s2431
      %s2434 = sshll.u32 [#allocation12], 4
      %s2435 = int_to_ptr.vmem [resolvable:$true] %s2434
      %2437 = dma.vmem_to_hbm [thread:$0]  %s2435, 16, %s6, [#allocation5]
    $region49: #{tpu_custom_call.1} parent=1 // pred_fallthru
      _
    // Predicated region
    $region50: #{tpu_custom_call.1} parent=1 // pred_check
      _
    $region51: #{tpu_custom_call.1} parent=1 // pred_check_branch
      %2439 = sbr.rel (0) target = $region53
    $region52: #{tpu_custom_call.1} parent=1 // pred_region
      %2440 = dma.done [#allocation5], 16
    $region53: #{tpu_custom_call.1} parent=1 // pred_fallthru
      _
    %2441 = vsyncpa [#allocation4], 1
    %2442 = vsyncpa [#allocation7], 1
    %2443 = vsyncpa [#allocation10], 1
    %2444 = vsyncpa [#allocation5], 1

</llo_original>
